<compile_context>
chip_gen: v7x
topology: tpu7x:2x2x1
jax: 0.10.0
libtpu: 0.0.40
codegen_flags: <defaults>
</compile_context>

<pallas_src>
import math
import numpy as np
import jax
import jax.numpy as jnp
from jax.experimental import pallas as pl
from jax.experimental.pallas import tpu as pltpu


# ----------------------- config + kernel-bank construction (host glue) ------
def get_kernel_size(sample_rate, hl, km):
    n = int(sample_rate * hl)
    k = 1
    while k < n * km:
        k *= 2
    return k


def make_green_params(low, high, fr_stride, hl, km, sr, t_stride):
    """NumPy re-implementation of GreenTF.make_kernel for decay_mode='uniform'."""
    n_freq = (high - low + 1) // fr_stride
    kernel_size = get_kernel_size(sr, hl, km)
    stride = t_stride * sr // 1000

    time = np.linspace((kernel_size - 1) / sr, 0.0, kernel_size,
                       dtype=np.float64)[None, :]                          # (1, K)
    frequency = np.linspace(low, high, n_freq, dtype=np.float64)[:, None]  # (F, 1)
    omega = 2.0 * math.pi * frequency
    omega2 = omega ** 2

    beta = math.log(2.0) / hl
    beta2 = beta ** 2
    beta2_omega2 = beta2 - omega2
    alpha = np.sqrt(np.abs(beta2_omega2))
    alpha_time = alpha * time                                              # (F, K)

    envelope = np.exp(-beta * time)                                        # (1, K)
    envelope[..., -1] *= 0.5

    idx_start_osc = None
    idx_critical = None
    idx_end_exp = None
    for i in range(n_freq):
        if beta2_omega2[i, 0] < 0:
            idx_start_osc = i
            break
    if idx_start_osc is not None and idx_start_osc > 0:
        if beta2_omega2[idx_start_osc - 1, 0] == 0:
            idx_critical = idx_start_osc - 1
            if idx_critical > 0:
                idx_end_exp = idx_critical
        else:
            idx_end_exp = idx_start_osc

    skernel = np.zeros_like(alpha_time)
    ckernel = np.zeros_like(alpha_time)
    if idx_end_exp is not None:
        skernel[:idx_end_exp] = np.sinh(alpha_time[:idx_end_exp])
        ckernel[:idx_end_exp] = np.cosh(alpha_time[:idx_end_exp])
    if idx_critical is not None:
        skernel[idx_critical] = 0.0
        ckernel[idx_critical] = 1.0
    if idx_start_osc is not None:
        skernel[idx_start_osc:] = np.sin(alpha_time[idx_start_osc:])
        ckernel[idx_start_osc:] = np.cos(alpha_time[idx_start_osc:])
    sckernel = np.concatenate([skernel, ckernel], axis=0)                  # (2F, K)

    envelope_area = envelope.sum(axis=-1, keepdims=True) / sr
    # conv kernel used by transform(): self.kernel * envelope / sample_rate
    conv_kernel = (sckernel * envelope / sr).astype(np.float32)            # (2F, K)
    norm_scale = np.float32(math.sqrt(8.0) / envelope_area[0, 0])          # normalize=True
    return dict(n_freq=n_freq, kernel_size=kernel_size, stride=stride,
                conv_kernel=conv_kernel, norm_scale=norm_scale)


# ----------------------- Pallas kernel --------------------------------------
def _grtf_kernel(cur_ref, ovl_ref, ks_ref, kc_ref, s_ref, c_ref, framesT_ref):
    """One (batch, time-tile) grid step.

    cur_ref   : (1, Sp, tt)  stride-major wav window for this time tile; time is
                the lane axis, Sp is sublane-granule-padded stride groups.
    ovl_ref   : (1, Sp, ow)  narrow overlap head of the *next* tile (only the
                first C-1 of its lanes are consumed).
    ks/kc_ref : (F, Kp)      norm-folded sin / cos kernel banks (constant
                index_map -> resident in VMEM across the whole grid).
    s/c out   : (1, F, tt)   channel-major spectrogram tiles, time lane-dense.
    framesT   : (Kp, tt)     VMEM scratch: transposed im2col tile built on-chip
                with full-vreg, sublane-aligned stores.
    """
    cur = cur_ref[0]                                    # (Sp, tt)
    ovl = ovl_ref[0]                                    # (Sp, ow)
    Sp, tt = cur.shape
    Kp = framesT_ref.shape[0]
    C = Kp // Sp

    # both[r, q] = wav_pad[(t0 + q)*S + r] for q in [0, tt + ow); lane-concat at
    # a 128-multiple offset, so it is layout-clean.
    both = jnp.concatenate([cur, ovl], axis=1)          # (Sp, tt + ow)

    # Build the transposed im2col tile in VMEM:
    #   framesT[c*Sp + r, t] = both[r, t + c] = wav_pad[(t0 + t + c)*S + r]
    # Each store is a full Sp-sublane-aligned, tt-lane-dense block (unmasked).
    # TODO(synk): for large C switch to lax.fori_loop + a K-reduction grid axis
    # (static unroll blows up trace size when C is in the hundreds).
    for c in range(C):                                  # static unroll, C = Kp // Sp
        framesT_ref[c * Sp:(c + 1) * Sp, :] = jax.lax.slice(both, (0, c), (Sp, c + tt))

    frames = framesT_ref[...]                           # (Kp, tt)

    # Two MXU matmuls written straight into the channel-major outputs
    # (no (2F, tt) intermediate to materialize and re-slice).
    s_ref[0] = jnp.dot(ks_ref[...], frames,
                       preferred_element_type=jnp.float32).astype(s_ref.dtype)
    c_ref[0] = jnp.dot(kc_ref[...], frames,
                       preferred_element_type=jnp.float32).astype(c_ref.dtype)


# ----------------------- wrapper ---------------------------------------------
def green_tf_forward(wav, params, tt=512, use_bf16_inputs=False,
                     out_dtype=jnp.float32):
    """GreenTF.forward (uniform decay, non-streaming, normalize=True)."""
    conv_kernel = params["conv_kernel"]                # (2F, K), unscaled
    K = int(params["kernel_size"])
    S = int(params["stride"])
    nf = int(params["n_freq"])
    norm = float(params["norm_scale"])

    batched = wav.ndim == 2
    if not batched:
        wav = wav[None, :]
    B, T = wav.shape
    t_out = (T - 1) // S + 1                           # VALID conv output length

    in_dtype = jnp.bfloat16 if use_bf16_inputs else jnp.float32
    itemsize = np.dtype(in_dtype).itemsize
    out_itemsize = np.dtype(out_dtype).itemsize

    # ---- static tiling arithmetic ----
    g = 16 if use_bf16_inputs else 8                   # sublane granule
    Sp = ((S + g - 1) // g) * g                        # stride groups padded to granule
    C = -(-K // S)                                     # taps grouped by conv stride
    Kp0 = C * S                                        # kernel taps padded to mult of S
    P = Kp0 - K                                        # left-zero taps
    Kp = C * Sp                                        # sublane-aligned contraction depth

    ow = 128 * (-(-C // 128))                          # narrow overlap head (>= C lanes)
    tt = max(int(tt), ow)
    tt = ((tt + ow - 1) // ow) * ow                    # lane-dense, multiple of ow (and 128)
    ratio = tt // ow
    nt = -(-t_out // tt)
    t_pad = nt * tt
    u_pad = nt * tt + ow                               # overlap head of the last tile exists

    two_f = conv_kernel.shape[0]

    # Fold normalization + causal-left zero taps + Sp sublane alignment into the
    # kernel bank once on the host, then split into sin / cos halves.
    k0 = np.zeros((two_f, Kp0), np.float32)
    k0[:, P:] = conv_kernel * norm
    kern_np = np.zeros((two_f, C, Sp), np.float32)
    kern_np[:, :, :S] = k0.reshape(two_f, C, S)
    kern_np = kern_np.reshape(two_f, Kp)
    kern_s = jnp.asarray(kern_np[:nf], dtype=in_dtype)           # (F, Kp)
    kern_c = jnp.asarray(kern_np[nf:], dtype=in_dtype)           # (F, Kp)

    # Causal left pad (Kp0-1 zeros) + right pad, then a stride-major reshape so
    # overlapping conv windows become contiguous lane slices:
    #   w3[b, r, u] = wav_pad[b, u*S + r]   (rows S..Sp-1 are zero padding)
    left = Kp0 - 1
    right = u_pad * S - left - T
    assert right >= 0
    wav_pad = jnp.pad(wav.astype(jnp.float32), ((0, 0), (left, right)))
    w3 = wav_pad.reshape(B, u_pad, S).transpose(0, 2, 1)          # (B, S, u_pad)
    w3 = jnp.pad(w3, ((0, 0), (0, Sp - S), (0, 0))).astype(in_dtype)   # (B, Sp, u_pad)

    cost = pl.CostEstimate(
        flops=int(2 * B * t_pad * Kp * two_f),
        transcendentals=0,
        bytes_accessed=int(B * nt * (tt + ow) * Sp * itemsize
                           + two_f * Kp * itemsize
                           + 2 * B * nf * t_pad * out_itemsize))

    # VMEM accounting (double-buffered inputs/outputs + resident bank + scratch);
    # only raise the scoped limit when the default 32 MiB is not enough, capped
    # at v7x's 64 MiB physical VMEM.
    vmem_est = (2 * Sp * (tt + ow) * itemsize          # cur + overlap windows (x2 buf)
                + 2 * two_f * Kp * itemsize            # kernel bank (worst-case x2 buf)
                + 2 * 2 * nf * tt * out_itemsize       # s/c output tiles (x2 buf)
                + Kp * tt * itemsize)                  # framesT scratch
    cp_kwargs = dict(dimension_semantics=("parallel", "parallel"))
    if vmem_est > (32 << 20):
        # TODO(synk): for banks that do not fit even then, add a frequency grid
        # axis so 2F is tiled instead of held resident.
        cp_kwargs["vmem_limit_bytes"] = int(min(vmem_est + (vmem_est >> 2), 64 << 20))

    sspec, cspec = pl.pallas_call(
        _grtf_kernel,
        out_shape=(jax.ShapeDtypeStruct((B, nf, t_pad), out_dtype),
                   jax.ShapeDtypeStruct((B, nf, t_pad), out_dtype)),
        grid_spec=pltpu.PrefetchScalarGridSpec(
            num_scalar_prefetch=0,
            grid=(B, nt),
            in_specs=[
                pl.BlockSpec((1, Sp, tt), lambda b, t: (b, 0, t)),              # current window
                pl.BlockSpec((1, Sp, ow), lambda b, t: (b, 0, (t + 1) * ratio)),  # overlap head
                pl.BlockSpec((nf, Kp), lambda b, t: (0, 0)),                    # sin bank (resident)
                pl.BlockSpec((nf, Kp), lambda b, t: (0, 0)),                    # cos bank (resident)
            ],
            out_specs=(pl.BlockSpec((1, nf, tt), lambda b, t: (b, 0, t)),
                       pl.BlockSpec((1, nf, tt), lambda b, t: (b, 0, t))),
            scratch_shapes=[pltpu.VMEM((Kp, tt), in_dtype)],
        ),
        compiler_params=pltpu.CompilerParams(**cp_kwargs),
        cost_estimate=cost,
    )(w3, w3, kern_s, kern_c)

    # Only slice off the time padding; layout is already torch's (B, F, T_out).
    sspec = sspec[:, :, :t_out]
    cspec = cspec[:, :, :t_out]
    if not batched:
        sspec, cspec = sspec[0], cspec[0]
    return sspec, cspec


# ----------------------- reference + demo / self-check -----------------------
def _reference(wav, params):
    K = params["kernel_size"]
    S = params["stride"]
    nf = params["n_freq"]
    w = wav if wav.ndim == 2 else wav[None, :]
    wav_pad = jnp.pad(w.astype(jnp.float32), ((0, 0), (K - 1, 0)))[:, None, :]   # (B,1,T+K-1)
    ck = jnp.asarray(params["conv_kernel"])[:, None, :]                          # (2F,1,K)
    spec = jax.lax.conv_general_dilated(
        wav_pad, ck, window_strides=(S,), padding="VALID",
        dimension_numbers=("NCH", "OIH", "NCH"),
        precision=jax.lax.Precision.HIGHEST) * params["norm_scale"]
    s, c = spec[:, :nf, :], spec[:, nf:, :]
    if wav.ndim == 1:
        s, c = s[0], c[0]
    return s, c


if __name__ == "__main__":
    # Scaled-down GreenTFConfig(low=0, high=63, fr_stride=1, hl=0.016, km=2,
    # sr=1000, t_stride=4)  ->  n_freq=64 (2F=128 channels), kernel_size=32, stride=4.
    params = make_green_params(low=0, high=63, fr_stride=1, hl=0.016,
                               km=2, sr=1000, t_stride=4)

    key = jax.random.PRNGKey(0)
    wav = jax.random.normal(key, (2, 2048), dtype=jnp.float32)     # (B, T)

    # f32 operand path (default): tight tolerances against the XLA conv reference.
    sspec, cspec = green_tf_forward(wav, params)                   # (2, 64, 512) each
    jax.block_until_ready((sspec, cspec))
    s_ref, c_ref = _reference(wav, params)
    np.testing.assert_allclose(np.asarray(sspec), np.asarray(s_ref), rtol=1e-4, atol=1e-5)
    np.testing.assert_allclose(np.asarray(cspec), np.asarray(c_ref), rtol=1e-4, atol=1e-5)

    # ragged / unbatched path: t_out (=250) not a multiple of the 512-wide tile
    wav1 = wav[0, :1000]
    s1, c1 = green_tf_forward(wav1, params)
    jax.block_until_ready((s1, c1))
    s1_ref, c1_ref = _reference(wav1, params)
    np.testing.assert_allclose(np.asarray(s1), np.asarray(s1_ref), rtol=1e-4, atol=1e-5)
    np.testing.assert_allclose(np.asarray(c1), np.asarray(c1_ref), rtol=1e-4, atol=1e-5)

    # bf16 operand + bf16 output path (f32 MXU accumulation): deliberately
    # loosened tolerances (operand rounding ~2^-8).
    sb, cb = green_tf_forward(wav, params, use_bf16_inputs=True,
                              out_dtype=jnp.bfloat16)
    jax.block_until_ready((sb, cb))
    np.testing.assert_allclose(np.asarray(sb.astype(jnp.float32)), np.asarray(s_ref),
                               rtol=2e-2, atol=6e-2)
    np.testing.assert_allclose(np.asarray(cb.astype(jnp.float32)), np.asarray(c_ref),
                               rtol=2e-2, atol=6e-2)

    print("KERNEL_OK")
</pallas_src>

<mosaic_0001>
module attributes {stable_mosaic.version = 11 : i64} {
  func.func @_grtf_kernel(%arg0: i32, %arg1: i32, %arg2: memref<1x8x512xf32, #tpu.memory_space<vmem>>, %arg3: memref<1x8x128xf32, #tpu.memory_space<vmem>>, %arg4: memref<64x64xf32, #tpu.memory_space<vmem>>, %arg5: memref<64x64xf32, #tpu.memory_space<vmem>>, %arg6: memref<1x64x512xf32, #tpu.memory_space<vmem>>, %arg7: memref<1x64x512xf32, #tpu.memory_space<vmem>>, %arg8: memref<64x512xf32, #tpu.memory_space<vmem>>) attributes {dimension_semantics = [#tpu.dimension_semantics<parallel>, #tpu.dimension_semantics<parallel>], iteration_bounds = array<i64: 2, 1>, scalar_prefetch = 0 : i64, scratch_operands = 1 : i64, tpu.core_type = #tpu.core_type<tc>, window_params = [{transform_indices = @transform_0, window_bounds = array<i64: 1, 8, 512>}, {transform_indices = @transform_1, window_bounds = array<i64: 1, 8, 128>}, {pipeline_mode = #tpu.pipeline_mode<synchronous>, transform_indices = @transform_2, window_bounds = array<i64: 64, 64>}, {pipeline_mode = #tpu.pipeline_mode<synchronous>, transform_indices = @transform_3, window_bounds = array<i64: 64, 64>}, {transform_indices = @transform_4, window_bounds = array<i64: 1, 64, 512>}, {transform_indices = @transform_5, window_bounds = array<i64: 1, 64, 512>}]} {
    %c0 = arith.constant 0 : index
    %c0_0 = arith.constant 0 : index
    %c0_1 = arith.constant 0 : index
    %0 = vector.load %arg2[%c0, %c0_0, %c0_1] : memref<1x8x512xf32, #tpu.memory_space<vmem>>, vector<1x8x512xf32>
    %1 = vector.shape_cast %0 : vector<1x8x512xf32> to vector<8x512xf32>
    %c0_2 = arith.constant 0 : index
    %c0_3 = arith.constant 0 : index
    %c0_4 = arith.constant 0 : index
    %2 = vector.load %arg3[%c0_2, %c0_3, %c0_4] : memref<1x8x128xf32, #tpu.memory_space<vmem>>, vector<1x8x128xf32>
    %3 = vector.shape_cast %2 : vector<1x8x128xf32> to vector<8x128xf32>
    %4 = tpu.concatenate %1, %3 in 1 : vector<8x512xf32>, vector<8x128xf32> -> vector<8x640xf32>
    %5 = vector.extract_strided_slice %4 {offsets = [0, 0], sizes = [8, 512], strides = [1, 1]} : vector<8x640xf32> to vector<8x512xf32>
    %c0_5 = arith.constant 0 : index
    %c0_6 = arith.constant 0 : index
    %6 = vector.load %arg8[%c0_5, %c0_6] : memref<64x512xf32, #tpu.memory_space<vmem>>, vector<8x512xf32>
    tpu.vector_store %arg8[%c0_5, %c0_6], %5 {strides = array<i32>} : memref<64x512xf32, #tpu.memory_space<vmem>>, vector<8x512xf32>,
    %7 = vector.extract_strided_slice %4 {offsets = [0, 1], sizes = [8, 512], strides = [1, 1]} : vector<8x640xf32> to vector<8x512xf32>
    %c8 = arith.constant 8 : index
    %c0_7 = arith.constant 0 : index
    %8 = vector.load %arg8[%c8, %c0_7] : memref<64x512xf32, #tpu.memory_space<vmem>>, vector<8x512xf32>
    tpu.vector_store %arg8[%c8, %c0_7], %7 {strides = array<i32>} : memref<64x512xf32, #tpu.memory_space<vmem>>, vector<8x512xf32>,
    %9 = vector.extract_strided_slice %4 {offsets = [0, 2], sizes = [8, 512], strides = [1, 1]} : vector<8x640xf32> to vector<8x512xf32>
    %c16 = arith.constant 16 : index
    %c0_8 = arith.constant 0 : index
    %10 = vector.load %arg8[%c16, %c0_8] : memref<64x512xf32, #tpu.memory_space<vmem>>, vector<8x512xf32>
    tpu.vector_store %arg8[%c16, %c0_8], %9 {strides = array<i32>} : memref<64x512xf32, #tpu.memory_space<vmem>>, vector<8x512xf32>,
    %11 = vector.extract_strided_slice %4 {offsets = [0, 3], sizes = [8, 512], strides = [1, 1]} : vector<8x640xf32> to vector<8x512xf32>
    %c24 = arith.constant 24 : index
    %c0_9 = arith.constant 0 : index
    %12 = vector.load %arg8[%c24, %c0_9] : memref<64x512xf32, #tpu.memory_space<vmem>>, vector<8x512xf32>
    tpu.vector_store %arg8[%c24, %c0_9], %11 {strides = array<i32>} : memref<64x512xf32, #tpu.memory_space<vmem>>, vector<8x512xf32>,
    %13 = vector.extract_strided_slice %4 {offsets = [0, 4], sizes = [8, 512], strides = [1, 1]} : vector<8x640xf32> to vector<8x512xf32>
    %c32 = arith.constant 32 : index
    %c0_10 = arith.constant 0 : index
    %14 = vector.load %arg8[%c32, %c0_10] : memref<64x512xf32, #tpu.memory_space<vmem>>, vector<8x512xf32>
    tpu.vector_store %arg8[%c32, %c0_10], %13 {strides = array<i32>} : memref<64x512xf32, #tpu.memory_space<vmem>>, vector<8x512xf32>,
    %15 = vector.extract_strided_slice %4 {offsets = [0, 5], sizes = [8, 512], strides = [1, 1]} : vector<8x640xf32> to vector<8x512xf32>
    %c40 = arith.constant 40 : index
    %c0_11 = arith.constant 0 : index
    %16 = vector.load %arg8[%c40, %c0_11] : memref<64x512xf32, #tpu.memory_space<vmem>>, vector<8x512xf32>
    tpu.vector_store %arg8[%c40, %c0_11], %15 {strides = array<i32>} : memref<64x512xf32, #tpu.memory_space<vmem>>, vector<8x512xf32>,
    %17 = vector.extract_strided_slice %4 {offsets = [0, 6], sizes = [8, 512], strides = [1, 1]} : vector<8x640xf32> to vector<8x512xf32>
    %c48 = arith.constant 48 : index
    %c0_12 = arith.constant 0 : index
    %18 = vector.load %arg8[%c48, %c0_12] : memref<64x512xf32, #tpu.memory_space<vmem>>, vector<8x512xf32>
    tpu.vector_store %arg8[%c48, %c0_12], %17 {strides = array<i32>} : memref<64x512xf32, #tpu.memory_space<vmem>>, vector<8x512xf32>,
    %19 = vector.extract_strided_slice %4 {offsets = [0, 7], sizes = [8, 512], strides = [1, 1]} : vector<8x640xf32> to vector<8x512xf32>
    %c56 = arith.constant 56 : index
    %c0_13 = arith.constant 0 : index
    %20 = vector.load %arg8[%c56, %c0_13] : memref<64x512xf32, #tpu.memory_space<vmem>>, vector<8x512xf32>
    tpu.vector_store %arg8[%c56, %c0_13], %19 {strides = array<i32>} : memref<64x512xf32, #tpu.memory_space<vmem>>, vector<8x512xf32>,
    %c0_14 = arith.constant 0 : index
    %c0_15 = arith.constant 0 : index
    %21 = vector.load %arg8[%c0_14, %c0_15] : memref<64x512xf32, #tpu.memory_space<vmem>>, vector<64x512xf32>
    %c0_16 = arith.constant 0 : index
    %c0_17 = arith.constant 0 : index
    %22 = vector.load %arg4[%c0_16, %c0_17] : memref<64x64xf32, #tpu.memory_space<vmem>>, vector<64x64xf32>
    %cst = arith.constant dense<0.000000e+00> : vector<64x512xf32>
    %23 = tpu.matmul %22, %21, %cst {dimension_numbers = #tpu.dot_dimension_numbers<[1], [0], [0], [1], [0, 0, 1, 1], [], []>} : vector<64x64xf32>, vector<64x512xf32>, vector<64x512xf32> -> vector<64x512xf32>
    %c0_18 = arith.constant 0 : index
    %c0_19 = arith.constant 0 : index
    %c0_20 = arith.constant 0 : index
    %24 = vector.load %arg6[%c0_18, %c0_19, %c0_20] : memref<1x64x512xf32, #tpu.memory_space<vmem>>, vector<1x64x512xf32>
    %25 = vector.shape_cast %24 : vector<1x64x512xf32> to vector<64x512xf32>
    %26 = vector.shape_cast %23 : vector<64x512xf32> to vector<1x64x512xf32>
    tpu.vector_store %arg6[%c0_18, %c0_19, %c0_20], %26 {strides = array<i32>} : memref<1x64x512xf32, #tpu.memory_space<vmem>>, vector<1x64x512xf32>,
    %c0_21 = arith.constant 0 : index
    %c0_22 = arith.constant 0 : index
    %27 = vector.load %arg5[%c0_21, %c0_22] : memref<64x64xf32, #tpu.memory_space<vmem>>, vector<64x64xf32>
    %cst_23 = arith.constant dense<0.000000e+00> : vector<64x512xf32>
    %28 = tpu.matmul %27, %21, %cst_23 {dimension_numbers = #tpu.dot_dimension_numbers<[1], [0], [0], [1], [0, 0, 1, 1], [], []>} : vector<64x64xf32>, vector<64x512xf32>, vector<64x512xf32> -> vector<64x512xf32>
    %c0_24 = arith.constant 0 : index
    %c0_25 = arith.constant 0 : index
    %c0_26 = arith.constant 0 : index
    %29 = vector.load %arg7[%c0_24, %c0_25, %c0_26] : memref<1x64x512xf32, #tpu.memory_space<vmem>>, vector<1x64x512xf32>
    %30 = vector.shape_cast %29 : vector<1x64x512xf32> to vector<64x512xf32>
    %31 = vector.shape_cast %28 : vector<64x512xf32> to vector<1x64x512xf32>
    tpu.vector_store %arg7[%c0_24, %c0_25, %c0_26], %31 {strides = array<i32>} : memref<1x64x512xf32, #tpu.memory_space<vmem>>, vector<1x64x512xf32>,
    return
  }
  func.func @transform_0(%arg0: i32, %arg1: i32) -> (i32, i32, i32) {
    %c0_i32 = arith.constant 0 : i32
    %c0_i32_0 = arith.constant 0 : i32
    return %arg0, %c0_i32, %arg1 : i32, i32, i32
  }
  func.func @transform_1(%arg0: i32, %arg1: i32) -> (i32, i32, i32) {
    %c1_i32 = arith.constant 1 : i32
    %0 = arith.addi %arg1, %c1_i32 : i32
    %c4_i32 = arith.constant 4 : i32
    %1 = arith.muli %0, %c4_i32 : i32
    %c0_i32 = arith.constant 0 : i32
    %c0_i32_0 = arith.constant 0 : i32
    return %arg0, %c0_i32, %1 : i32, i32, i32
  }
  func.func @transform_2(%arg0: i32, %arg1: i32) -> (i32, i32) {
    %c0_i32 = arith.constant 0 : i32
    %c0_i32_0 = arith.constant 0 : i32
    %c0_i32_1 = arith.constant 0 : i32
    return %c0_i32, %c0_i32_0 : i32, i32
  }
  func.func @transform_3(%arg0: i32, %arg1: i32) -> (i32, i32) {
    %c0_i32 = arith.constant 0 : i32
    %c0_i32_0 = arith.constant 0 : i32
    %c0_i32_1 = arith.constant 0 : i32
    return %c0_i32, %c0_i32_0 : i32, i32
  }
  func.func @transform_4(%arg0: i32, %arg1: i32) -> (i32, i32, i32) {
    %c0_i32 = arith.constant 0 : i32
    %c0_i32_0 = arith.constant 0 : i32
    return %arg0, %c0_i32, %arg1 : i32, i32, i32
  }
  func.func @transform_5(%arg0: i32, %arg1: i32) -> (i32, i32, i32) {
    %c0_i32 = arith.constant 0 : i32
    %c0_i32_0 = arith.constant 0 : i32
    return %arg0, %c0_i32, %arg1 : i32, i32, i32
  }
}

</mosaic_0001>

<llo_original>
// kernel: tpu_custom_call.1
$region0: #{tpu_custom_call.1}
  #allocation0 [shape = 'u32[]', space=smem, size = 0x4, offset = 0x4, fixed_abs, tag = 'smem constant byte address 0x4 - core index']
  #allocation1 [shape = 'u32[144,128]{1,0:T(1,128)}', space=vmem, size = 0x12000, scoped, tag = 'internal scratch']
  #allocation2 [shape = 'f32[64,512]{1,0:T(8,128)}', space=vmem, size = 0x20000, scoped, tag = 'scratch operand']
  %s0 = inlined_call_operand.hbm [shape: f32[2,8,640], index: 0, kind: input, shape index: {}]
  %s1 = inlined_call_operand.hbm [shape: f32[2,8,640], index: 1, kind: input, shape index: {}]
  %s2 = inlined_call_operand.hbm [shape: f32[64,64], index: 2, kind: input, shape index: {}]
  %s3 = inlined_call_operand.hbm [shape: f32[64,64], index: 3, kind: input, shape index: {}]
  %s4 = inlined_call_operand.hbm [shape: f32[2,64,512], index: 4, kind: output, shape index: {0}]
  %s5 = inlined_call_operand.hbm [shape: f32[2,64,512], index: 5, kind: output, shape index: {1}]
  %6 = xla_tuple %s4, %s5
  %s7 = sld [smem:[#allocation0]]
  $region73: #{tpu_custom_call.1} parent=0
    _
  %s9 = ssub.s32 1, %s7
  %s10 = scalar_select 0, %s9, %s7
  $region1: #{tpu_custom_call.1} parent=0
    #allocation3 [shape = 'u8[32768]{0}', space=vmem, size = 0x8000, scoped, tag = 'input window, operand 0']
    #allocation4 [shape = 's32[2]{0}', space=sflag, size = 0x8, scoped, tag = 'scoped memory for tpu_custom_call.1']
    #allocation5 [shape = 's32[2]{0}', space=sflag, size = 0x8, scoped, tag = 'scoped memory for tpu_custom_call.1']
    #allocation6 [shape = 'u8[8192]{0}', space=vmem, size = 0x2000, scoped, tag = 'input window, operand 1']
    #allocation7 [shape = 's32[2]{0}', space=sflag, size = 0x8, scoped, tag = 'scoped memory for tpu_custom_call.1']
    #allocation8 [shape = 'u8[32768]{0}', space=vmem, size = 0x8000, scoped, tag = 'input window, operand 2, single buffered']
    #allocation9 [shape = 'u8[32768]{0}', space=vmem, size = 0x8000, scoped, tag = 'input window, operand 3, single buffered']
    #allocation10 [shape = 's32[1]{0}', space=sflag, size = 0x4, scoped, tag = 'scoped memory for tpu_custom_call.1']
    #allocation11 [shape = 'u8[262144]{0}', space=vmem, size = 0x40000, scoped, tag = 'output window, operand 0']
    #allocation12 [shape = 'u8[262144]{0}', space=vmem, size = 0x40000, scoped, tag = 'output window, operand 1']
    #allocation13 [shape = 's32[2]{0}', space=sflag, size = 0x8, scoped, tag = 'scoped memory for tpu_custom_call.1']
    %11 = vsyncpa [#allocation4], 0
    %s12 = scalar_lea.sflag [#allocation4], 1
    %13 = vsyncpa %s12, 0
    %14 = vsyncpa [#allocation7], 0
    %s15 = scalar_lea.sflag [#allocation7], 1
    %16 = vsyncpa %s15, 0
    %17 = vsyncpa [#allocation10], 0
    %18 = vsyncpa [#allocation5], 0
    %s19 = scalar_lea.sflag [#allocation5], 1
    %20 = vsyncpa %s19, 0
    %21 = vsyncpa [#allocation13], 0
    %s22 = scalar_lea.sflag [#allocation13], 1
    %23 = vsyncpa %s22, 0
    loop: start=0, step=1, limit=4
    $region2: #{tpu_custom_call.1} parent=1 // loop_pre_header
      _
    $region3: #{tpu_custom_call.1} parent=1 // loop_header
      %s25 = sphi 0, %s29
      %p26 = scmp.ge.s32.totalorder %s25, 4
      %s32 = sphi 0, %s44
      %s33 = sphi 0, %s40
      %s34 = sphi 0, %s32
      %s35 = sphi 0, %s33
      %s36 = sphi 0, %s34
      %s37 = sphi 0, %s35
      %s49 = sphi 0, %s51
      %s52 = sphi 0, %s49
      %s53 = sphi 0, %s52
      %s69 = sphi 0, %s53
      %s81 = sphi 0, %s83
      %s84 = sphi 0, %s81
      %s85 = sphi 0, %s84
      %s101 = sphi 0, %s85
      %s105 = sphi 0, %s105
      %s107 = sphi 0, %s105
      %s108 = sphi 0, %s107
      %s122 = sphi 0, %s108
      %s126 = sphi 0, %s126
      %s128 = sphi 0, %s126
      %s129 = sphi 0, %s128
      %s143 = sphi 0, %s129
      %s151 = sphi 0, %s153
      %s154 = sphi 0, %s151
      %s155 = sphi 0, %s154
      %s171 = sphi 0, %s155
      %s179 = sphi 0, %s181
      %s182 = sphi 0, %s179
      %s183 = sphi 0, %s182
      %s199 = sphi 0, %s183
    $region4: #{tpu_custom_call.1} parent=1 // loop_header_branch
      %28 = sbr.rel (%p26) target = $region8
    $region5: #{tpu_custom_call.1} parent=1 // loop_body
      %s30 = ssub.s32 %s25, 1
      %s31 = ssub.s32 %s25, 2
      %s38 = sadd.s32 1, %s33
      %p39 = scmp.ge.s32.totalorder %s38, 1
      %s40 = scalar_select %p39, 0, %s38
      %s41 = sadd.s32 1, %s32
      %s42 = scalar_select %p39, %s41, %s32
      %p43 = scmp.ge.s32.totalorder %s42, 2
      %s44 = scalar_select %p43, 0, %s42
      %s45 = ssub.s32 %s32, %s44
      %s46 = ssub.s32 %s33, %s40
      %s47 = sor.u32 %s45, %s46
      %p48 = scmp.eq.s32.totalorder %s47, 0
      %s50 = sadd.s32 %s49, 1
      %s51 = scalar_select %p48, %s49, %s50
      %p54 = pneg %p48
      %p55 = scmp.eq.s32.totalorder %s25, 1
      %p56 = por %p54, %p55
      %p57 = scmp.ne.s32.totalorder %s49, %s52
      %p58 = scmp.eq.s32.totalorder %s25, 0
      %p59 = por %p57, %p58
      %p60 = scmp.ne.s32.totalorder %s49, %s52
      %p61 = scmp.eq.s32.totalorder %s30, 1
      %p62 = por %p60, %p61
      %p63 = scmp.ne.s32.totalorder %s52, %s53
      %p64 = scmp.eq.s32.totalorder %s30, 0
      %p65 = por %p63, %p64
      %p66 = scmp.ne.s32.totalorder %s52, %s53
      %p67 = scmp.eq.s32.totalorder %s31, 1
      %p68 = por %p66, %p67
      %p70 = scmp.ne.s32.totalorder %s53, %s69
      %p71 = scmp.eq.s32.totalorder %s31, 0
      %p72 = por %p70, %p71
      %s73 = sadd.s32 %s33, 1
      %s74 = smul.u32 %s73, 4
      %s75 = sadd.s32 %s40, 1
      %s76 = smul.u32 %s75, 4
      %s77 = ssub.s32 %s32, %s44
      %s78 = ssub.s32 %s74, %s76
      %s79 = sor.u32 %s77, %s78
      %p80 = scmp.eq.s32.totalorder %s79, 0
      %s82 = sadd.s32 %s81, 1
      %s83 = scalar_select %p80, %s81, %s82
      %p86 = pneg %p80
      %p87 = scmp.eq.s32.totalorder %s25, 1
      %p88 = por %p86, %p87
      %p89 = scmp.ne.s32.totalorder %s81, %s84
      %p90 = scmp.eq.s32.totalorder %s25, 0
      %p91 = por %p89, %p90
      %p92 = scmp.ne.s32.totalorder %s81, %s84
      %p93 = scmp.eq.s32.totalorder %s30, 1
      %p94 = por %p92, %p93
      %p95 = scmp.ne.s32.totalorder %s84, %s85
      %p96 = scmp.eq.s32.totalorder %s30, 0
      %p97 = por %p95, %p96
      %p98 = scmp.ne.s32.totalorder %s84, %s85
      %p99 = scmp.eq.s32.totalorder %s31, 1
      %p100 = por %p98, %p99
      %p102 = scmp.ne.s32.totalorder %s85, %s101
      %p103 = scmp.eq.s32.totalorder %s31, 0
      %p104 = por %p102, %p103
      %s106 = sadd.s32 %s105, 1
      %p109 = scmp.eq.s32.totalorder %s25, 1
      %p110 = scmp.ne.s32.totalorder %s105, %s107
      %p111 = scmp.eq.s32.totalorder %s25, 0
      %p112 = por %p110, %p111
      %p113 = scmp.ne.s32.totalorder %s105, %s107
      %p114 = scmp.eq.s32.totalorder %s30, 1
      %p115 = por %p113, %p114
      %p116 = scmp.ne.s32.totalorder %s107, %s108
      %p117 = scmp.eq.s32.totalorder %s30, 0
      %p118 = por %p116, %p117
      %p119 = scmp.ne.s32.totalorder %s107, %s108
      %p120 = scmp.eq.s32.totalorder %s31, 1
      %p121 = por %p119, %p120
      %p123 = scmp.ne.s32.totalorder %s108, %s122
      %p124 = scmp.eq.s32.totalorder %s31, 0
      %p125 = por %p123, %p124
      %s127 = sadd.s32 %s126, 1
      %p130 = scmp.eq.s32.totalorder %s25, 1
      %p131 = scmp.ne.s32.totalorder %s126, %s128
      %p132 = scmp.eq.s32.totalorder %s25, 0
      %p133 = por %p131, %p132
      %p134 = scmp.ne.s32.totalorder %s126, %s128
      %p135 = scmp.eq.s32.totalorder %s30, 1
      %p136 = por %p134, %p135
      %p137 = scmp.ne.s32.totalorder %s128, %s129
      %p138 = scmp.eq.s32.totalorder %s30, 0
      %p139 = por %p137, %p138
      %p140 = scmp.ne.s32.totalorder %s128, %s129
      %p141 = scmp.eq.s32.totalorder %s31, 1
      %p142 = por %p140, %p141
      %p144 = scmp.ne.s32.totalorder %s129, %s143
      %p145 = scmp.eq.s32.totalorder %s31, 0
      %p146 = por %p144, %p145
      %s147 = ssub.s32 %s32, %s44
      %s148 = ssub.s32 %s33, %s40
      %s149 = sor.u32 %s147, %s148
      %p150 = scmp.eq.s32.totalorder %s149, 0
      %s152 = sadd.s32 %s151, 1
      %s153 = scalar_select %p150, %s151, %s152
      %p156 = pneg %p150
      %p157 = scmp.eq.s32.totalorder %s25, 1
      %p158 = por %p156, %p157
      %p159 = scmp.ne.s32.totalorder %s151, %s154
      %p160 = scmp.eq.s32.totalorder %s25, 0
      %p161 = por %p159, %p160
      %p162 = scmp.ne.s32.totalorder %s151, %s154
      %p163 = scmp.eq.s32.totalorder %s30, 1
      %p164 = por %p162, %p163
      %p165 = scmp.ne.s32.totalorder %s154, %s155
      %p166 = scmp.eq.s32.totalorder %s30, 0
      %p167 = por %p165, %p166
      %p168 = scmp.ne.s32.totalorder %s154, %s155
      %p169 = scmp.eq.s32.totalorder %s31, 1
      %p170 = por %p168, %p169
      %p172 = scmp.ne.s32.totalorder %s155, %s171
      %p173 = scmp.eq.s32.totalorder %s31, 0
      %p174 = por %p172, %p173
      %s175 = ssub.s32 %s32, %s44
      %s176 = ssub.s32 %s33, %s40
      %s177 = sor.u32 %s175, %s176
      %p178 = scmp.eq.s32.totalorder %s177, 0
      %s180 = sadd.s32 %s179, 1
      %s181 = scalar_select %p178, %s179, %s180
      %p184 = pneg %p178
      %p185 = scmp.eq.s32.totalorder %s25, 1
      %p186 = por %p184, %p185
      %p187 = scmp.ne.s32.totalorder %s179, %s182
      %p188 = scmp.eq.s32.totalorder %s25, 0
      %p189 = por %p187, %p188
      %p190 = scmp.ne.s32.totalorder %s179, %s182
      %p191 = scmp.eq.s32.totalorder %s30, 1
      %p192 = por %p190, %p191
      %p193 = scmp.ne.s32.totalorder %s182, %s183
      %p194 = scmp.eq.s32.totalorder %s30, 0
      %p195 = por %p193, %p194
      %p196 = scmp.ne.s32.totalorder %s182, %s183
      %p197 = scmp.eq.s32.totalorder %s31, 1
      %p198 = por %p196, %p197
      %p200 = scmp.ne.s32.totalorder %s183, %s199
      %p201 = scmp.eq.s32.totalorder %s31, 0
      %p202 = por %p200, %p201
      %p203 = scmp.le.s32.totalorder 1, %s25
      %p204 = scmp.lt.s32.totalorder %s25, 3
      %p205 = pnand %p203, %p204
      %p206 = pneg %p205
      // Predicated region
      $region9: #{tpu_custom_call.1} parent=5 // pred_check
        _
      $region10: #{tpu_custom_call.1} parent=5 // pred_check_branch
        %208 = sbr.rel (%p205) target = $region12
      $region11: #{tpu_custom_call.1} parent=5 // pred_region
        %s209 = ssub.s32 %s25, 1
        // Predicated region
        $region13: #{tpu_custom_call.1} parent=11 // pred_check
          %p210 = pneg %p118
        $region14: #{tpu_custom_call.1} parent=11 // pred_check_branch
          %212 = sbr.rel (%p210) target = $region16
        $region15: #{tpu_custom_call.1} parent=11 // pred_region
          %s214 = ssub.s32 1024, 1024
          %215 = vsyncadd [#allocation7], %s214
          %s216 = sshll.u32 [#allocation8], 4
          %s217 = int_to_ptr.vmem [resolvable:$true] %s216
          %222 = dma.hbm_to_vmem [thread:$0]  %s2, 1024, %s217, [#allocation7], 128, 128, 8
        $region16: #{tpu_custom_call.1} parent=11 // pred_fallthru
          _
        // Predicated region
        $region17: #{tpu_custom_call.1} parent=11 // pred_check
          %p223 = pneg %p139
        $region18: #{tpu_custom_call.1} parent=11 // pred_check_branch
          %225 = sbr.rel (%p223) target = $region20
        $region19: #{tpu_custom_call.1} parent=11 // pred_region
          %s227 = ssub.s32 1024, 1024
          %228 = vsyncadd [#allocation10], %s227
          %s229 = sshll.u32 [#allocation9], 4
          %s230 = int_to_ptr.vmem [resolvable:$true] %s229
          %235 = dma.hbm_to_vmem [thread:$0]  %s3, 1024, %s230, [#allocation10], 128, 128, 8
        $region20: #{tpu_custom_call.1} parent=11 // pred_fallthru
          _
      $region12: #{tpu_custom_call.1} parent=5 // pred_fallthru
        _
      %p236 = scmp.lt.s32.totalorder %s25, 2
      // Predicated region
      $region21: #{tpu_custom_call.1} parent=5 // pred_check
        %p237 = pneg %p236
      $region22: #{tpu_custom_call.1} parent=5 // pred_check_branch
        %239 = sbr.rel (%p237) target = $region24
      $region23: #{tpu_custom_call.1} parent=5 // pred_region
        // Predicated region
        $region25: #{tpu_custom_call.1} parent=23 // pred_check
          %p240 = pneg %p59
        $region26: #{tpu_custom_call.1} parent=23 // pred_check_branch
          %242 = sbr.rel (%p240) target = $region28
        $region27: #{tpu_custom_call.1} parent=23 // pred_region
          %s243 = sand.u32 %s49, 1
          %s244 = scalar_lea.sflag [#allocation4], %s243
          %s245 = sand.u32 %s49, 1
          %s246 = smul.addr %s245, 32
          %s247 = scalar_lea.vmem [#allocation3], %s246
          %s248 = smul.u32 4, %s33
          %s249 = ssub.s32 5, %s248
          %p250 = scmp.lt.s32.totalorder %s249, 4
          %s251 = scalar_select %p250, %s249, 4
          %s252 = smul.u32 128, %s251
          %s254 = ssub.s32 512, %s252
          %255 = vsyncadd %s244, %s254
          %p256 = scmp.ne.s32.totalorder 0, %s252
          %s257 = smul.addr %s32, 5
          %s258 = sadd.s32 %s248, %s257
          %s259 = smul.addr %s258, 128
          %s260 = scalar_lea.hbm %s0, %s259
          %s261 = smul.u32 %s251, 8
          %s262 = sshll.u32 %s261, 4
          %s263 = sshll.u32 %s247, 4
          %s264 = int_to_ptr.vmem [resolvable:$true] %s263
          %266 = dma.hbm_to_vmem [thread:$0]  (%p256), %s260, %s262, %s264, %s244
        $region28: #{tpu_custom_call.1} parent=23 // pred_fallthru
          _
        // Predicated region
        $region29: #{tpu_custom_call.1} parent=23 // pred_check
          %p267 = pneg %p91
        $region30: #{tpu_custom_call.1} parent=23 // pred_check_branch
          %269 = sbr.rel (%p267) target = $region32
        $region31: #{tpu_custom_call.1} parent=23 // pred_region
          %s270 = sand.u32 %s25, 1
          %s271 = scalar_lea.sflag [#allocation7], %s270
          %s272 = sand.u32 %s81, 1
          %s273 = smul.addr %s272, 8
          %s274 = scalar_lea.vmem [#allocation6], %s273
          %s275 = sadd.s32 %s33, 1
          %s276 = smul.u32 %s275, 4
          %s278 = ssub.s32 128, 128
          %279 = vsyncadd %s271, %s278
          %s280 = smul.addr %s32, 5
          %s281 = sadd.s32 %s276, %s280
          %s282 = smul.addr %s281, 128
          %s283 = scalar_lea.hbm %s1, %s282
          %s285 = sshll.u32 %s274, 4
          %s286 = int_to_ptr.vmem [resolvable:$true] %s285
          %288 = dma.hbm_to_vmem [thread:$0]  %s283, 128, %s286, %s271
        $region32: #{tpu_custom_call.1} parent=23 // pred_fallthru
          _
      $region24: #{tpu_custom_call.1} parent=5 // pred_fallthru
        _
      %p289 = scmp.le.s32.totalorder 1, %s25
      %p290 = scmp.lt.s32.totalorder %s25, 3
      %p291 = pnand %p289, %p290
      %p292 = pneg %p291
      // Predicated region
      $region33: #{tpu_custom_call.1} parent=5 // pred_check
        _
      $region34: #{tpu_custom_call.1} parent=5 // pred_check_branch
        %294 = sbr.rel (%p291) target = $region36
      $region35: #{tpu_custom_call.1} parent=5 // pred_region
        %s295 = ssub.s32 %s25, 1
        %s296 = sand.u32 %s52, 1
        %s297 = scalar_lea.sflag [#allocation4], %s296
        %s298 = sand.u32 %s52, 1
        %s299 = smul.addr %s298, 32
        %s300 = scalar_lea.vmem [#allocation3], %s299
        // Predicated region
        $region37: #{tpu_custom_call.1} parent=35 // pred_check
          %p301 = pneg %p65
        $region38: #{tpu_custom_call.1} parent=35 // pred_check_branch
          %303 = sbr.rel (%p301) target = $region40
        $region39: #{tpu_custom_call.1} parent=35 // pred_region
          %304 = dma.done %s297, 512
        $region40: #{tpu_custom_call.1} parent=35 // pred_fallthru
          _
        %s305 = sand.u32 %s30, 1
        %s306 = scalar_lea.sflag [#allocation7], %s305
        %s307 = sand.u32 %s84, 1
        %s308 = smul.addr %s307, 8
        %s309 = scalar_lea.vmem [#allocation6], %s308
        // Predicated region
        $region41: #{tpu_custom_call.1} parent=35 // pred_check
          %p310 = pneg %p97
        $region42: #{tpu_custom_call.1} parent=35 // pred_check_branch
          %312 = sbr.rel (%p310) target = $region44
        $region43: #{tpu_custom_call.1} parent=35 // pred_region
          %313 = dma.done %s306, 128
        $region44: #{tpu_custom_call.1} parent=35 // pred_fallthru
          _
        // Predicated region
        $region45: #{tpu_custom_call.1} parent=35 // pred_check
          %p314 = pneg %p118
        $region46: #{tpu_custom_call.1} parent=35 // pred_check_branch
          %316 = sbr.rel (%p314) target = $region48
        $region47: #{tpu_custom_call.1} parent=35 // pred_region
          %317 = dma.done [#allocation7], 1024
        $region48: #{tpu_custom_call.1} parent=35 // pred_fallthru
          _
        // Predicated region
        $region49: #{tpu_custom_call.1} parent=35 // pred_check
          %p318 = pneg %p139
        $region50: #{tpu_custom_call.1} parent=35 // pred_check_branch
          %320 = sbr.rel (%p318) target = $region52
        $region51: #{tpu_custom_call.1} parent=35 // pred_region
          %321 = dma.done [#allocation10], 1024
        $region52: #{tpu_custom_call.1} parent=35 // pred_fallthru
          _
        %s322 = sand.u32 %s52, 1
        %s323 = scalar_lea.sflag [#allocation4], %s322
        %s324 = sand.u32 %s52, 1
        %s325 = smul.addr %s324, 32
        %s326 = scalar_lea.vmem [#allocation3], %s325
        %p327 = pneg %p65
        %p328 = pneg %p62
        %s329 = sand.u32 %s30, 1
        %s330 = scalar_lea.sflag [#allocation7], %s329
        %s331 = sand.u32 %s84, 1
        %s332 = smul.addr %s331, 8
        %s333 = scalar_lea.vmem [#allocation6], %s332
        %p334 = pneg %p97
        %p335 = pneg %p94
        %p336 = pneg %p118
        %p337 = pneg %p115
        %p338 = pneg %p139
        %p339 = pneg %p136
        %p340 = pneg %p167
        %p341 = pneg %p164
        %s342 = sand.u32 %s154, 1
        %s343 = scalar_lea.sflag [#allocation5], %s342
        %s344 = sand.u32 %s154, 1
        %s345 = smul.addr %s344, 256
        %s346 = scalar_lea.vmem [#allocation11], %s345
        %p347 = pneg %p195
        %p348 = pneg %p192
        %s349 = sand.u32 %s182, 1
        %s350 = scalar_lea.sflag [#allocation13], %s349
        %s351 = sand.u32 %s182, 1
        %s352 = smul.addr %s351, 256
        %s353 = scalar_lea.vmem [#allocation12], %s352
        %s354 = smul.u32 4, %s35
        %s355 = ssub.s32 5, %s354
        %p356 = scmp.lt.s32.totalorder %s355, 4
        %s357 = scalar_select %p356, %s355, 4
        %s358 = smul.u32 128, %s357
        %s359 = sadd.s32 %s35, 1
        %s360 = smul.u32 %s359, 4
        %s361 = smul.u32 4, %s35
        %s362 = smul.u32 4, %s35
        %v363 = vld [vmem:[%s300] sm:$0xff]
        %v364 = vld [vmem:[%s300 + $0x8] sm:$0xff]
        %v365 = vld [vmem:[%s300 + $0x10] sm:$0xff]
        %v366 = vld [vmem:[%s300 + $0x18] sm:$0xff]
        %v367 = vld [vmem:[%s309] sm:$0xff]
        %368 = vst [vmem:[#allocation2] sm:$0xff] %v363
        %369 = vst [vmem:[#allocation2 + $0x8] sm:$0xff] %v364
        %370 = vst [vmem:[#allocation2 + $0x10] sm:$0xff] %v365
        %371 = vst [vmem:[#allocation2 + $0x18] sm:$0xff] %v366
        %377 = vrot.lane.b32.xlu0 %v363, 127
        %v378 = vpop.permute.xlu0 %377
        %379 = vrot.lane.b32.xlu0 %v364, 127
        %v380 = vpop.permute.xlu0 %379
        %381 = vrot.lane.b32.xlu0 %v365, 127
        %v382 = vpop.permute.xlu0 %381
        %383 = vrot.lane.b32.xlu0 %v366, 127
        %v384 = vpop.permute.xlu0 %383
        %385 = vrot.lane.b32.xlu0 %v367, 127
        %v386 = vpop.permute.xlu0 %385
        %vm387 = vcmask 1039360
        %v388 = vsel %vm387, %v378, %v380
        %v389 = vsel %vm387, %v380, %v382
        %v390 = vsel %vm387, %v382, %v384
        %v391 = vsel %vm387, %v384, %v386
        %396 = vst [vmem:[#allocation2 + $0x20] sm:$0xff] %v388
        %397 = vst [vmem:[#allocation2 + $0x28] sm:$0xff] %v389
        %398 = vst [vmem:[#allocation2 + $0x30] sm:$0xff] %v390
        %399 = vst [vmem:[#allocation2 + $0x38] sm:$0xff] %v391
        %400 = vrot.lane.b32.xlu0 %v363, 126
        %v401 = vpop.permute.xlu0 %400
        %402 = vrot.lane.b32.xlu0 %v364, 126
        %v403 = vpop.permute.xlu0 %402
        %404 = vrot.lane.b32.xlu0 %v365, 126
        %v405 = vpop.permute.xlu0 %404
        %406 = vrot.lane.b32.xlu0 %v366, 126
        %v407 = vpop.permute.xlu0 %406
        %408 = vrot.lane.b32.xlu0 %v367, 126
        %v409 = vpop.permute.xlu0 %408
        %vm410 = vcmask 1031168
        %v411 = vsel %vm410, %v401, %v403
        %v412 = vsel %vm410, %v403, %v405
        %v413 = vsel %vm410, %v405, %v407
        %v414 = vsel %vm410, %v407, %v409
        %419 = vst [vmem:[#allocation2 + $0x40] sm:$0xff] %v411
        %420 = vst [vmem:[#allocation2 + $0x48] sm:$0xff] %v412
        %421 = vst [vmem:[#allocation2 + $0x50] sm:$0xff] %v413
        %422 = vst [vmem:[#allocation2 + $0x58] sm:$0xff] %v414
        %423 = vrot.lane.b32.xlu0 %v363, 125
        %v424 = vpop.permute.xlu0 %423
        %425 = vrot.lane.b32.xlu0 %v364, 125
        %v426 = vpop.permute.xlu0 %425
        %427 = vrot.lane.b32.xlu0 %v365, 125
        %v428 = vpop.permute.xlu0 %427
        %429 = vrot.lane.b32.xlu0 %v366, 125
        %v430 = vpop.permute.xlu0 %429
        %431 = vrot.lane.b32.xlu0 %v367, 125
        %v432 = vpop.permute.xlu0 %431
        %vm433 = vcmask 1022976
        %v434 = vsel %vm433, %v424, %v426
        %v435 = vsel %vm433, %v426, %v428
        %v436 = vsel %vm433, %v428, %v430
        %v437 = vsel %vm433, %v430, %v432
        %442 = vst [vmem:[#allocation2 + $0x60] sm:$0xff] %v434
        %443 = vst [vmem:[#allocation2 + $0x68] sm:$0xff] %v435
        %444 = vst [vmem:[#allocation2 + $0x70] sm:$0xff] %v436
        %445 = vst [vmem:[#allocation2 + $0x78] sm:$0xff] %v437
        %446 = vrot.lane.b32.xlu0 %v363, 124
        %v447 = vpop.permute.xlu0 %446
        %448 = vrot.lane.b32.xlu0 %v364, 124
        %v449 = vpop.permute.xlu0 %448
        %450 = vrot.lane.b32.xlu0 %v365, 124
        %v451 = vpop.permute.xlu0 %450
        %452 = vrot.lane.b32.xlu0 %v366, 124
        %v453 = vpop.permute.xlu0 %452
        %454 = vrot.lane.b32.xlu0 %v367, 124
        %v455 = vpop.permute.xlu0 %454
        %vm456 = vcmask 1014784
        %v457 = vsel %vm456, %v447, %v449
        %v458 = vsel %vm456, %v449, %v451
        %v459 = vsel %vm456, %v451, %v453
        %v460 = vsel %vm456, %v453, %v455
        %465 = vst [vmem:[#allocation2 + $0x80] sm:$0xff] %v457
        %466 = vst [vmem:[#allocation2 + $0x88] sm:$0xff] %v458
        %467 = vst [vmem:[#allocation2 + $0x90] sm:$0xff] %v459
        %468 = vst [vmem:[#allocation2 + $0x98] sm:$0xff] %v460
        %469 = vrot.lane.b32.xlu0 %v363, 123
        %v470 = vpop.permute.xlu0 %469
        %471 = vrot.lane.b32.xlu0 %v364, 123
        %v472 = vpop.permute.xlu0 %471
        %473 = vrot.lane.b32.xlu0 %v365, 123
        %v474 = vpop.permute.xlu0 %473
        %475 = vrot.lane.b32.xlu0 %v366, 123
        %v476 = vpop.permute.xlu0 %475
        %477 = vrot.lane.b32.xlu0 %v367, 123
        %v478 = vpop.permute.xlu0 %477
        %vm479 = vcmask 1006592
        %v480 = vsel %vm479, %v470, %v472
        %v481 = vsel %vm479, %v472, %v474
        %v482 = vsel %vm479, %v474, %v476
        %v483 = vsel %vm479, %v476, %v478
        %488 = vst [vmem:[#allocation2 + $0xa0] sm:$0xff] %v480
        %489 = vst [vmem:[#allocation2 + $0xa8] sm:$0xff] %v481
        %490 = vst [vmem:[#allocation2 + $0xb0] sm:$0xff] %v482
        %491 = vst [vmem:[#allocation2 + $0xb8] sm:$0xff] %v483
        %492 = vrot.lane.b32.xlu0 %v363, 122
        %v493 = vpop.permute.xlu0 %492
        %494 = vrot.lane.b32.xlu0 %v364, 122
        %v495 = vpop.permute.xlu0 %494
        %496 = vrot.lane.b32.xlu0 %v365, 122
        %v497 = vpop.permute.xlu0 %496
        %498 = vrot.lane.b32.xlu0 %v366, 122
        %v499 = vpop.permute.xlu0 %498
        %500 = vrot.lane.b32.xlu0 %v367, 122
        %v501 = vpop.permute.xlu0 %500
        %vm502 = vcmask 998400
        %v503 = vsel %vm502, %v493, %v495
        %v504 = vsel %vm502, %v495, %v497
        %v505 = vsel %vm502, %v497, %v499
        %v506 = vsel %vm502, %v499, %v501
        %511 = vst [vmem:[#allocation2 + $0xc0] sm:$0xff] %v503
        %512 = vst [vmem:[#allocation2 + $0xc8] sm:$0xff] %v504
        %513 = vst [vmem:[#allocation2 + $0xd0] sm:$0xff] %v505
        %514 = vst [vmem:[#allocation2 + $0xd8] sm:$0xff] %v506
        %515 = vrot.lane.b32.xlu0 %v363, 121
        %v516 = vpop.permute.xlu0 %515
        %517 = vrot.lane.b32.xlu0 %v364, 121
        %v518 = vpop.permute.xlu0 %517
        %519 = vrot.lane.b32.xlu0 %v365, 121
        %v520 = vpop.permute.xlu0 %519
        %521 = vrot.lane.b32.xlu0 %v366, 121
        %v522 = vpop.permute.xlu0 %521
        %523 = vrot.lane.b32.xlu0 %v367, 121
        %v524 = vpop.permute.xlu0 %523
        %vm525 = vcmask 990208
        %v526 = vsel %vm525, %v516, %v518
        %v527 = vsel %vm525, %v518, %v520
        %v528 = vsel %vm525, %v520, %v522
        %v529 = vsel %vm525, %v522, %v524
        %534 = vst [vmem:[#allocation2 + $0xe0] sm:$0xff] %v526
        %535 = vst [vmem:[#allocation2 + $0xe8] sm:$0xff] %v527
        %536 = vst [vmem:[#allocation2 + $0xf0] sm:$0xff] %v528
        %537 = vst [vmem:[#allocation2 + $0xf8] sm:$0xff] %v529
        %v538 = vld [vmem:[#allocation2] sm:$0xff]
        %v539 = vld [vmem:[#allocation2 + $0x8] sm:$0xff]
        %v540 = vld [vmem:[#allocation2 + $0x10] sm:$0xff]
        %v541 = vld [vmem:[#allocation2 + $0x18] sm:$0xff]
        %v542 = vld [vmem:[#allocation2 + $0x20] sm:$0xff]
        %v543 = vld [vmem:[#allocation2 + $0x28] sm:$0xff]
        %v544 = vld [vmem:[#allocation2 + $0x30] sm:$0xff]
        %v545 = vld [vmem:[#allocation2 + $0x38] sm:$0xff]
        %v546 = vld [vmem:[#allocation2 + $0x40] sm:$0xff]
        %v547 = vld [vmem:[#allocation2 + $0x48] sm:$0xff]
        %v548 = vld [vmem:[#allocation2 + $0x50] sm:$0xff]
        %v549 = vld [vmem:[#allocation2 + $0x58] sm:$0xff]
        %v550 = vld [vmem:[#allocation2 + $0x60] sm:$0xff]
        %v551 = vld [vmem:[#allocation2 + $0x68] sm:$0xff]
        %v552 = vld [vmem:[#allocation2 + $0x70] sm:$0xff]
        %v553 = vld [vmem:[#allocation2 + $0x78] sm:$0xff]
        %v554 = vld [vmem:[#allocation2 + $0x80] sm:$0xff]
        %v555 = vld [vmem:[#allocation2 + $0x88] sm:$0xff]
        %v556 = vld [vmem:[#allocation2 + $0x90] sm:$0xff]
        %v557 = vld [vmem:[#allocation2 + $0x98] sm:$0xff]
        %v558 = vld [vmem:[#allocation2 + $0xa0] sm:$0xff]
        %v559 = vld [vmem:[#allocation2 + $0xa8] sm:$0xff]
        %v560 = vld [vmem:[#allocation2 + $0xb0] sm:$0xff]
        %v561 = vld [vmem:[#allocation2 + $0xb8] sm:$0xff]
        %v562 = vld [vmem:[#allocation2 + $0xc0] sm:$0xff]
        %v563 = vld [vmem:[#allocation2 + $0xc8] sm:$0xff]
        %v564 = vld [vmem:[#allocation2 + $0xd0] sm:$0xff]
        %v565 = vld [vmem:[#allocation2 + $0xd8] sm:$0xff]
        %v566 = vld [vmem:[#allocation2 + $0xe0] sm:$0xff]
        %v567 = vld [vmem:[#allocation2 + $0xe8] sm:$0xff]
        %v568 = vld [vmem:[#allocation2 + $0xf0] sm:$0xff]
        %v569 = vld [vmem:[#allocation2 + $0xf8] sm:$0xff]
        %v570 = vld [vmem:[#allocation8] sm:$0xff]
        %v571 = vld [vmem:[#allocation8 + $0x8] sm:$0xff]
        %v572 = vld [vmem:[#allocation8 + $0x10] sm:$0xff]
        %v573 = vld [vmem:[#allocation8 + $0x18] sm:$0xff]
        %v574 = vld [vmem:[#allocation8 + $0x20] sm:$0xff]
        %v575 = vld [vmem:[#allocation8 + $0x28] sm:$0xff]
        %v576 = vld [vmem:[#allocation8 + $0x30] sm:$0xff]
        %v577 = vld [vmem:[#allocation8 + $0x38] sm:$0xff]
        %vm578 = vcmask 523264
        %v580 = vsel %vm578, %v570, 0
        %v583 = vsel %vm578, %v571, 0
        %v586 = vsel %vm578, %v572, 0
        %v589 = vsel %vm578, %v573, 0
        %v592 = vsel %vm578, %v574, 0
        %v595 = vsel %vm578, %v575, 0
        %v598 = vsel %vm578, %v576, 0
        %v601 = vsel %vm578, %v577, 0
        %603 = vmatprep.subr.mxu0 %v539
        %604 = vmatpush1.msra.mxu0 %v538
        %605 = vmatprep.subr.mxu0 %v543
        %606 = vmatpush1.msra.mxu0 %v542
        %607 = vmatprep.subr.mxu0 %v547
        %608 = vmatpush1.msra.mxu0 %v546
        %609 = vmatprep.subr.mxu0 %v551
        %610 = vmatpush1.msra.mxu0 %v550
        %611 = vmatprep.subr.mxu0 %v555
        %612 = vmatpush1.msra.mxu0 %v554
        %613 = vmatprep.subr.mxu0 %v559
        %614 = vmatpush1.msra.mxu0 %v558
        %615 = vmatprep.subr.mxu0 %v563
        %616 = vmatpush1.msra.mxu0 %v562
        %617 = vmatprep.subr.mxu0 %v567
        %618 = vmatpush1.msra.mxu0 %v566
        %619 = vmatprep.subr.mxu0 0.0
        %620 = vmatpush1.msra.mxu0 0.0
        %621 = vmatprep.subr.mxu0 0.0
        %622 = vmatpush1.msra.mxu0 0.0
        %623 = vmatprep.subr.mxu0 0.0
        %624 = vmatpush1.msra.mxu0 0.0
        %625 = vmatprep.subr.mxu0 0.0
        %626 = vmatpush1.msra.mxu0 0.0
        %627 = vmatprep.subr.mxu0 0.0
        %628 = vmatpush1.msra.mxu0 0.0
        %629 = vmatprep.subr.mxu0 0.0
        %630 = vmatpush1.msra.mxu0 0.0
        %631 = vmatprep.subr.mxu0 0.0
        %632 = vmatpush1.msra.mxu0 0.0
        %633 = vmatprep.subr.mxu0 0.0
        %634 = vmatpush1.msra.mxu0 0.0
        %635 = vmatprep.subr.mxu0 0.0
        %636 = vmatpush1.msra.mxu0 0.0
        %637 = vmatprep.subr.mxu0 0.0
        %638 = vmatpush1.msra.mxu0 0.0
        %639 = vmatprep.subr.mxu0 0.0
        %640 = vmatpush1.msra.mxu0 0.0
        %641 = vmatprep.subr.mxu0 0.0
        %642 = vmatpush1.msra.mxu0 0.0
        %643 = vmatprep.subr.mxu0 0.0
        %644 = vmatpush1.msra.mxu0 0.0
        %645 = vmatprep.subr.mxu0 0.0
        %646 = vmatpush1.msra.mxu0 0.0
        %647 = vmatprep.subr.mxu0 0.0
        %648 = vmatpush1.msra.mxu0 0.0
        %649 = vmatprep.subr.mxu0 0.0
        %650 = vmatpush1.msra.mxu0 0.0
        %651 = vmatprep.subr.mxu0 0.0
        %652 = vmatpush1.msra.mxu0 0.0
        %653 = vmatprep.subr.mxu0 0.0
        %654 = vmatpush1.msra.mxu0 0.0
        %655 = vmatprep.subr.mxu0 0.0
        %656 = vmatpush1.msra.mxu0 0.0
        %657 = vmatprep.subr.mxu0 0.0
        %658 = vmatpush1.msra.mxu0 0.0
        %659 = vmatprep.subr.mxu0 0.0
        %660 = vmatpush1.msra.mxu0 0.0
        %661 = vmatprep.subr.mxu0 0.0
        %662 = vmatpush1.msra.mxu0 0.0
        %663 = vmatprep.subr.mxu0 0.0
        %664 = vmatpush1.msra.mxu0 0.0
        %665 = vmatprep.subr.mxu0 0.0
        %666 = vmatpush1.msra.mxu0 0.0
        %667 = vmatprep.mubr.f32.mxu0 0.0
        %668 = vmatmul.mubr.f32.gmra.mrb[0].mxu0 %v580
        %v669 = vpop.f32.mrb[0].mxu0
        %v670 = vadd.f32 0.0, %v669
        %v671 = vpop.f32.mrb[0].mxu0
        %v672 = vadd.f32 0.0, %v671
        %673 = vmatprep.mubr.f32.mxu0 0.0
        %674 = vmatmul.mubr.f32.gmra.mrb[0].mxu0 %v583
        %v675 = vpop.f32.mrb[0].mxu0
        %v676 = vadd.f32 0.0, %v675
        %v677 = vpop.f32.mrb[0].mxu0
        %v678 = vadd.f32 0.0, %v677
        %679 = vmatprep.mubr.f32.mxu0 0.0
        %680 = vmatmul.mubr.f32.gmra.mrb[0].mxu0 %v586
        %v681 = vpop.f32.mrb[0].mxu0
        %v682 = vadd.f32 0.0, %v681
        %v683 = vpop.f32.mrb[0].mxu0
        %v684 = vadd.f32 0.0, %v683
        %685 = vmatprep.mubr.f32.mxu0 0.0
        %686 = vmatmul.mubr.f32.gmra.mrb[0].mxu0 %v589
        %v687 = vpop.f32.mrb[0].mxu0
        %v688 = vadd.f32 0.0, %v687
        %v689 = vpop.f32.mrb[0].mxu0
        %v690 = vadd.f32 0.0, %v689
        %691 = vmatprep.mubr.f32.mxu0 0.0
        %692 = vmatmul.mubr.f32.gmra.mrb[0].mxu0 %v592
        %v693 = vpop.f32.mrb[0].mxu0
        %v694 = vadd.f32 0.0, %v693
        %v695 = vpop.f32.mrb[0].mxu0
        %v696 = vadd.f32 0.0, %v695
        %697 = vmatprep.mubr.f32.mxu0 0.0
        %698 = vmatmul.mubr.f32.gmra.mrb[0].mxu0 %v595
        %v699 = vpop.f32.mrb[0].mxu0
        %v700 = vadd.f32 0.0, %v699
        %v701 = vpop.f32.mrb[0].mxu0
        %v702 = vadd.f32 0.0, %v701
        %703 = vmatprep.mubr.f32.mxu0 0.0
        %704 = vmatmul.mubr.f32.gmra.mrb[0].mxu0 %v598
        %v705 = vpop.f32.mrb[0].mxu0
        %v706 = vadd.f32 0.0, %v705
        %v707 = vpop.f32.mrb[0].mxu0
        %v708 = vadd.f32 0.0, %v707
        %709 = vmatprep.mubr.f32.mxu0 0.0
        %710 = vmatmul.mubr.f32.gmra.mrb[0].mxu0 %v601
        %v711 = vpop.f32.mrb[0].mxu0
        %v712 = vadd.f32 0.0, %v711
        %v713 = vpop.f32.mrb[0].mxu0
        %v714 = vadd.f32 0.0, %v713
        %715 = vdwg.mxu0
        %716 = vmatprep.subr.mxu0 %v541
        %717 = vmatpush1.msra.mxu0 %v540
        %718 = vmatprep.subr.mxu0 %v545
        %719 = vmatpush1.msra.mxu0 %v544
        %720 = vmatprep.subr.mxu0 %v549
        %721 = vmatpush1.msra.mxu0 %v548
        %722 = vmatprep.subr.mxu0 %v553
        %723 = vmatpush1.msra.mxu0 %v552
        %724 = vmatprep.subr.mxu0 %v557
        %725 = vmatpush1.msra.mxu0 %v556
        %726 = vmatprep.subr.mxu0 %v561
        %727 = vmatpush1.msra.mxu0 %v560
        %728 = vmatprep.subr.mxu0 %v565
        %729 = vmatpush1.msra.mxu0 %v564
        %730 = vmatprep.subr.mxu0 %v569
        %731 = vmatpush1.msra.mxu0 %v568
        %732 = vmatprep.subr.mxu0 0.0
        %733 = vmatpush1.msra.mxu0 0.0
        %734 = vmatprep.subr.mxu0 0.0
        %735 = vmatpush1.msra.mxu0 0.0
        %736 = vmatprep.subr.mxu0 0.0
        %737 = vmatpush1.msra.mxu0 0.0
        %738 = vmatprep.subr.mxu0 0.0
        %739 = vmatpush1.msra.mxu0 0.0
        %740 = vmatprep.subr.mxu0 0.0
        %741 = vmatpush1.msra.mxu0 0.0
        %742 = vmatprep.subr.mxu0 0.0
        %743 = vmatpush1.msra.mxu0 0.0
        %744 = vmatprep.subr.mxu0 0.0
        %745 = vmatpush1.msra.mxu0 0.0
        %746 = vmatprep.subr.mxu0 0.0
        %747 = vmatpush1.msra.mxu0 0.0
        %748 = vmatprep.subr.mxu0 0.0
        %749 = vmatpush1.msra.mxu0 0.0
        %750 = vmatprep.subr.mxu0 0.0
        %751 = vmatpush1.msra.mxu0 0.0
        %752 = vmatprep.subr.mxu0 0.0
        %753 = vmatpush1.msra.mxu0 0.0
        %754 = vmatprep.subr.mxu0 0.0
        %755 = vmatpush1.msra.mxu0 0.0
        %756 = vmatprep.subr.mxu0 0.0
        %757 = vmatpush1.msra.mxu0 0.0
        %758 = vmatprep.subr.mxu0 0.0
        %759 = vmatpush1.msra.mxu0 0.0
        %760 = vmatprep.subr.mxu0 0.0
        %761 = vmatpush1.msra.mxu0 0.0
        %762 = vmatprep.subr.mxu0 0.0
        %763 = vmatpush1.msra.mxu0 0.0
        %764 = vmatprep.subr.mxu0 0.0
        %765 = vmatpush1.msra.mxu0 0.0
        %766 = vmatprep.subr.mxu0 0.0
        %767 = vmatpush1.msra.mxu0 0.0
        %768 = vmatprep.subr.mxu0 0.0
        %769 = vmatpush1.msra.mxu0 0.0
        %770 = vmatprep.subr.mxu0 0.0
        %771 = vmatpush1.msra.mxu0 0.0
        %772 = vmatprep.subr.mxu0 0.0
        %773 = vmatpush1.msra.mxu0 0.0
        %774 = vmatprep.subr.mxu0 0.0
        %775 = vmatpush1.msra.mxu0 0.0
        %776 = vmatprep.subr.mxu0 0.0
        %777 = vmatpush1.msra.mxu0 0.0
        %778 = vmatprep.subr.mxu0 0.0
        %779 = vmatpush1.msra.mxu0 0.0
        %780 = vmatprep.mubr.f32.mxu0 0.0
        %781 = vmatmul.mubr.f32.gmra.mrb[0].mxu0 %v580
        %v782 = vpop.f32.mrb[0].mxu0
        %v783 = vadd.f32 0.0, %v782
        %v784 = vpop.f32.mrb[0].mxu0
        %v785 = vadd.f32 0.0, %v784
        %786 = vmatprep.mubr.f32.mxu0 0.0
        %787 = vmatmul.mubr.f32.gmra.mrb[0].mxu0 %v583
        %v788 = vpop.f32.mrb[0].mxu0
        %v789 = vadd.f32 0.0, %v788
        %v790 = vpop.f32.mrb[0].mxu0
        %v791 = vadd.f32 0.0, %v790
        %792 = vmatprep.mubr.f32.mxu0 0.0
        %793 = vmatmul.mubr.f32.gmra.mrb[0].mxu0 %v586
        %v794 = vpop.f32.mrb[0].mxu0
        %v795 = vadd.f32 0.0, %v794
        %v796 = vpop.f32.mrb[0].mxu0
        %v797 = vadd.f32 0.0, %v796
        %798 = vmatprep.mubr.f32.mxu0 0.0
        %799 = vmatmul.mubr.f32.gmra.mrb[0].mxu0 %v589
        %v800 = vpop.f32.mrb[0].mxu0
        %v801 = vadd.f32 0.0, %v800
        %v802 = vpop.f32.mrb[0].mxu0
        %v803 = vadd.f32 0.0, %v802
        %804 = vmatprep.mubr.f32.mxu0 0.0
        %805 = vmatmul.mubr.f32.gmra.mrb[0].mxu0 %v592
        %v806 = vpop.f32.mrb[0].mxu0
        %v807 = vadd.f32 0.0, %v806
        %v808 = vpop.f32.mrb[0].mxu0
        %v809 = vadd.f32 0.0, %v808
        %810 = vmatprep.mubr.f32.mxu0 0.0
        %811 = vmatmul.mubr.f32.gmra.mrb[0].mxu0 %v595
        %v812 = vpop.f32.mrb[0].mxu0
        %v813 = vadd.f32 0.0, %v812
        %v814 = vpop.f32.mrb[0].mxu0
        %v815 = vadd.f32 0.0, %v814
        %816 = vmatprep.mubr.f32.mxu0 0.0
        %817 = vmatmul.mubr.f32.gmra.mrb[0].mxu0 %v598
        %v818 = vpop.f32.mrb[0].mxu0
        %v819 = vadd.f32 0.0, %v818
        %v820 = vpop.f32.mrb[0].mxu0
        %v821 = vadd.f32 0.0, %v820
        %822 = vmatprep.mubr.f32.mxu0 0.0
        %823 = vmatmul.mubr.f32.gmra.mrb[0].mxu0 %v601
        %v824 = vpop.f32.mrb[0].mxu0
        %v825 = vadd.f32 0.0, %v824
        %v826 = vpop.f32.mrb[0].mxu0
        %v827 = vadd.f32 0.0, %v826
        %828 = vdwg.mxu0
        %829 = vst [vmem:[%s346] sm:$0xff] %v670
        %830 = vst [vmem:[%s346 + $0x8] sm:$0xff] %v672
        %831 = vst [vmem:[%s346 + $0x10] sm:$0xff] %v783
        %832 = vst [vmem:[%s346 + $0x18] sm:$0xff] %v785
        %833 = vst [vmem:[%s346 + $0x20] sm:$0xff] %v676
        %834 = vst [vmem:[%s346 + $0x28] sm:$0xff] %v678
        %835 = vst [vmem:[%s346 + $0x30] sm:$0xff] %v789
        %836 = vst [vmem:[%s346 + $0x38] sm:$0xff] %v791
        %837 = vst [vmem:[%s346 + $0x40] sm:$0xff] %v682
        %838 = vst [vmem:[%s346 + $0x48] sm:$0xff] %v684
        %839 = vst [vmem:[%s346 + $0x50] sm:$0xff] %v795
        %840 = vst [vmem:[%s346 + $0x58] sm:$0xff] %v797
        %841 = vst [vmem:[%s346 + $0x60] sm:$0xff] %v688
        %842 = vst [vmem:[%s346 + $0x68] sm:$0xff] %v690
        %843 = vst [vmem:[%s346 + $0x70] sm:$0xff] %v801
        %844 = vst [vmem:[%s346 + $0x78] sm:$0xff] %v803
        %845 = vst [vmem:[%s346 + $0x80] sm:$0xff] %v694
        %846 = vst [vmem:[%s346 + $0x88] sm:$0xff] %v696
        %847 = vst [vmem:[%s346 + $0x90] sm:$0xff] %v807
        %848 = vst [vmem:[%s346 + $0x98] sm:$0xff] %v809
        %849 = vst [vmem:[%s346 + $0xa0] sm:$0xff] %v700
        %850 = vst [vmem:[%s346 + $0xa8] sm:$0xff] %v702
        %851 = vst [vmem:[%s346 + $0xb0] sm:$0xff] %v813
        %852 = vst [vmem:[%s346 + $0xb8] sm:$0xff] %v815
        %853 = vst [vmem:[%s346 + $0xc0] sm:$0xff] %v706
        %854 = vst [vmem:[%s346 + $0xc8] sm:$0xff] %v708
        %855 = vst [vmem:[%s346 + $0xd0] sm:$0xff] %v819
        %856 = vst [vmem:[%s346 + $0xd8] sm:$0xff] %v821
        %857 = vst [vmem:[%s346 + $0xe0] sm:$0xff] %v712
        %858 = vst [vmem:[%s346 + $0xe8] sm:$0xff] %v714
        %859 = vst [vmem:[%s346 + $0xf0] sm:$0xff] %v825
        %860 = vst [vmem:[%s346 + $0xf8] sm:$0xff] %v827
        %v861 = vld [vmem:[#allocation9] sm:$0xff]
        %v862 = vld [vmem:[#allocation9 + $0x8] sm:$0xff]
        %v863 = vld [vmem:[#allocation9 + $0x10] sm:$0xff]
        %v864 = vld [vmem:[#allocation9 + $0x18] sm:$0xff]
        %v865 = vld [vmem:[#allocation9 + $0x20] sm:$0xff]
        %v866 = vld [vmem:[#allocation9 + $0x28] sm:$0xff]
        %v867 = vld [vmem:[#allocation9 + $0x30] sm:$0xff]
        %v868 = vld [vmem:[#allocation9 + $0x38] sm:$0xff]
        %v870 = vsel %vm578, %v861, 0
        %v873 = vsel %vm578, %v862, 0
        %v876 = vsel %vm578, %v863, 0
        %v879 = vsel %vm578, %v864, 0
        %v882 = vsel %vm578, %v865, 0
        %v885 = vsel %vm578, %v866, 0
        %v888 = vsel %vm578, %v867, 0
        %v891 = vsel %vm578, %v868, 0
        %893 = vmatprep.subr.mxu0 %v539
        %894 = vmatpush1.msra.mxu0 %v538
        %895 = vmatprep.subr.mxu0 %v543
        %896 = vmatpush1.msra.mxu0 %v542
        %897 = vmatprep.subr.mxu0 %v547
        %898 = vmatpush1.msra.mxu0 %v546
        %899 = vmatprep.subr.mxu0 %v551
        %900 = vmatpush1.msra.mxu0 %v550
        %901 = vmatprep.subr.mxu0 %v555
        %902 = vmatpush1.msra.mxu0 %v554
        %903 = vmatprep.subr.mxu0 %v559
        %904 = vmatpush1.msra.mxu0 %v558
        %905 = vmatprep.subr.mxu0 %v563
        %906 = vmatpush1.msra.mxu0 %v562
        %907 = vmatprep.subr.mxu0 %v567
        %908 = vmatpush1.msra.mxu0 %v566
        %909 = vmatprep.subr.mxu0 0.0
        %910 = vmatpush1.msra.mxu0 0.0
        %911 = vmatprep.subr.mxu0 0.0
        %912 = vmatpush1.msra.mxu0 0.0
        %913 = vmatprep.subr.mxu0 0.0
        %914 = vmatpush1.msra.mxu0 0.0
        %915 = vmatprep.subr.mxu0 0.0
        %916 = vmatpush1.msra.mxu0 0.0
        %917 = vmatprep.subr.mxu0 0.0
        %918 = vmatpush1.msra.mxu0 0.0
        %919 = vmatprep.subr.mxu0 0.0
        %920 = vmatpush1.msra.mxu0 0.0
        %921 = vmatprep.subr.mxu0 0.0
        %922 = vmatpush1.msra.mxu0 0.0
        %923 = vmatprep.subr.mxu0 0.0
        %924 = vmatpush1.msra.mxu0 0.0
        %925 = vmatprep.subr.mxu0 0.0
        %926 = vmatpush1.msra.mxu0 0.0
        %927 = vmatprep.subr.mxu0 0.0
        %928 = vmatpush1.msra.mxu0 0.0
        %929 = vmatprep.subr.mxu0 0.0
        %930 = vmatpush1.msra.mxu0 0.0
        %931 = vmatprep.subr.mxu0 0.0
        %932 = vmatpush1.msra.mxu0 0.0
        %933 = vmatprep.subr.mxu0 0.0
        %934 = vmatpush1.msra.mxu0 0.0
        %935 = vmatprep.subr.mxu0 0.0
        %936 = vmatpush1.msra.mxu0 0.0
        %937 = vmatprep.subr.mxu0 0.0
        %938 = vmatpush1.msra.mxu0 0.0
        %939 = vmatprep.subr.mxu0 0.0
        %940 = vmatpush1.msra.mxu0 0.0
        %941 = vmatprep.subr.mxu0 0.0
        %942 = vmatpush1.msra.mxu0 0.0
        %943 = vmatprep.subr.mxu0 0.0
        %944 = vmatpush1.msra.mxu0 0.0
        %945 = vmatprep.subr.mxu0 0.0
        %946 = vmatpush1.msra.mxu0 0.0
        %947 = vmatprep.subr.mxu0 0.0
        %948 = vmatpush1.msra.mxu0 0.0
        %949 = vmatprep.subr.mxu0 0.0
        %950 = vmatpush1.msra.mxu0 0.0
        %951 = vmatprep.subr.mxu0 0.0
        %952 = vmatpush1.msra.mxu0 0.0
        %953 = vmatprep.subr.mxu0 0.0
        %954 = vmatpush1.msra.mxu0 0.0
        %955 = vmatprep.subr.mxu0 0.0
        %956 = vmatpush1.msra.mxu0 0.0
        %957 = vmatprep.mubr.f32.mxu0 0.0
        %958 = vmatmul.mubr.f32.gmra.mrb[0].mxu0 %v870
        %v959 = vpop.f32.mrb[0].mxu0
        %v960 = vadd.f32 0.0, %v959
        %v961 = vpop.f32.mrb[0].mxu0
        %v962 = vadd.f32 0.0, %v961
        %963 = vmatprep.mubr.f32.mxu0 0.0
        %964 = vmatmul.mubr.f32.gmra.mrb[0].mxu0 %v873
        %v965 = vpop.f32.mrb[0].mxu0
        %v966 = vadd.f32 0.0, %v965
        %v967 = vpop.f32.mrb[0].mxu0
        %v968 = vadd.f32 0.0, %v967
        %969 = vmatprep.mubr.f32.mxu0 0.0
        %970 = vmatmul.mubr.f32.gmra.mrb[0].mxu0 %v876
        %v971 = vpop.f32.mrb[0].mxu0
        %v972 = vadd.f32 0.0, %v971
        %v973 = vpop.f32.mrb[0].mxu0
        %v974 = vadd.f32 0.0, %v973
        %975 = vmatprep.mubr.f32.mxu0 0.0
        %976 = vmatmul.mubr.f32.gmra.mrb[0].mxu0 %v879
        %v977 = vpop.f32.mrb[0].mxu0
        %v978 = vadd.f32 0.0, %v977
        %v979 = vpop.f32.mrb[0].mxu0
        %v980 = vadd.f32 0.0, %v979
        %981 = vmatprep.mubr.f32.mxu0 0.0
        %982 = vmatmul.mubr.f32.gmra.mrb[0].mxu0 %v882
        %v983 = vpop.f32.mrb[0].mxu0
        %v984 = vadd.f32 0.0, %v983
        %v985 = vpop.f32.mrb[0].mxu0
        %v986 = vadd.f32 0.0, %v985
        %987 = vmatprep.mubr.f32.mxu0 0.0
        %988 = vmatmul.mubr.f32.gmra.mrb[0].mxu0 %v885
        %v989 = vpop.f32.mrb[0].mxu0
        %v990 = vadd.f32 0.0, %v989
        %v991 = vpop.f32.mrb[0].mxu0
        %v992 = vadd.f32 0.0, %v991
        %993 = vmatprep.mubr.f32.mxu0 0.0
        %994 = vmatmul.mubr.f32.gmra.mrb[0].mxu0 %v888
        %v995 = vpop.f32.mrb[0].mxu0
        %v996 = vadd.f32 0.0, %v995
        %v997 = vpop.f32.mrb[0].mxu0
        %v998 = vadd.f32 0.0, %v997
        %999 = vmatprep.mubr.f32.mxu0 0.0
        %1000 = vmatmul.mubr.f32.gmra.mrb[0].mxu0 %v891
        %v1001 = vpop.f32.mrb[0].mxu0
        %v1002 = vadd.f32 0.0, %v1001
        %v1003 = vpop.f32.mrb[0].mxu0
        %v1004 = vadd.f32 0.0, %v1003
        %1005 = vdwg.mxu0
        %1006 = vmatprep.subr.mxu0 %v541
        %1007 = vmatpush1.msra.mxu0 %v540
        %1008 = vmatprep.subr.mxu0 %v545
        %1009 = vmatpush1.msra.mxu0 %v544
        %1010 = vmatprep.subr.mxu0 %v549
        %1011 = vmatpush1.msra.mxu0 %v548
        %1012 = vmatprep.subr.mxu0 %v553
        %1013 = vmatpush1.msra.mxu0 %v552
        %1014 = vmatprep.subr.mxu0 %v557
        %1015 = vmatpush1.msra.mxu0 %v556
        %1016 = vmatprep.subr.mxu0 %v561
        %1017 = vmatpush1.msra.mxu0 %v560
        %1018 = vmatprep.subr.mxu0 %v565
        %1019 = vmatpush1.msra.mxu0 %v564
        %1020 = vmatprep.subr.mxu0 %v569
        %1021 = vmatpush1.msra.mxu0 %v568
        %1022 = vmatprep.subr.mxu0 0.0
        %1023 = vmatpush1.msra.mxu0 0.0
        %1024 = vmatprep.subr.mxu0 0.0
        %1025 = vmatpush1.msra.mxu0 0.0
        %1026 = vmatprep.subr.mxu0 0.0
        %1027 = vmatpush1.msra.mxu0 0.0
        %1028 = vmatprep.subr.mxu0 0.0
        %1029 = vmatpush1.msra.mxu0 0.0
        %1030 = vmatprep.subr.mxu0 0.0
        %1031 = vmatpush1.msra.mxu0 0.0
        %1032 = vmatprep.subr.mxu0 0.0
        %1033 = vmatpush1.msra.mxu0 0.0
        %1034 = vmatprep.subr.mxu0 0.0
        %1035 = vmatpush1.msra.mxu0 0.0
        %1036 = vmatprep.subr.mxu0 0.0
        %1037 = vmatpush1.msra.mxu0 0.0
        %1038 = vmatprep.subr.mxu0 0.0
        %1039 = vmatpush1.msra.mxu0 0.0
        %1040 = vmatprep.subr.mxu0 0.0
        %1041 = vmatpush1.msra.mxu0 0.0
        %1042 = vmatprep.subr.mxu0 0.0
        %1043 = vmatpush1.msra.mxu0 0.0
        %1044 = vmatprep.subr.mxu0 0.0
        %1045 = vmatpush1.msra.mxu0 0.0
        %1046 = vmatprep.subr.mxu0 0.0
        %1047 = vmatpush1.msra.mxu0 0.0
        %1048 = vmatprep.subr.mxu0 0.0
        %1049 = vmatpush1.msra.mxu0 0.0
        %1050 = vmatprep.subr.mxu0 0.0
        %1051 = vmatpush1.msra.mxu0 0.0
        %1052 = vmatprep.subr.mxu0 0.0
        %1053 = vmatpush1.msra.mxu0 0.0
        %1054 = vmatprep.subr.mxu0 0.0
        %1055 = vmatpush1.msra.mxu0 0.0
        %1056 = vmatprep.subr.mxu0 0.0
        %1057 = vmatpush1.msra.mxu0 0.0
        %1058 = vmatprep.subr.mxu0 0.0
        %1059 = vmatpush1.msra.mxu0 0.0
        %1060 = vmatprep.subr.mxu0 0.0
        %1061 = vmatpush1.msra.mxu0 0.0
        %1062 = vmatprep.subr.mxu0 0.0
        %1063 = vmatpush1.msra.mxu0 0.0
        %1064 = vmatprep.subr.mxu0 0.0
        %1065 = vmatpush1.msra.mxu0 0.0
        %1066 = vmatprep.subr.mxu0 0.0
        %1067 = vmatpush1.msra.mxu0 0.0
        %1068 = vmatprep.subr.mxu0 0.0
        %1069 = vmatpush1.msra.mxu0 0.0
        %1070 = vmatprep.mubr.f32.mxu0 0.0
        %1071 = vmatmul.mubr.f32.gmra.mrb[0].mxu0 %v870
        %v1072 = vpop.f32.mrb[0].mxu0
        %v1073 = vadd.f32 0.0, %v1072
        %v1074 = vpop.f32.mrb[0].mxu0
        %v1075 = vadd.f32 0.0, %v1074
        %1076 = vmatprep.mubr.f32.mxu0 0.0
        %1077 = vmatmul.mubr.f32.gmra.mrb[0].mxu0 %v873
        %v1078 = vpop.f32.mrb[0].mxu0
        %v1079 = vadd.f32 0.0, %v1078
        %v1080 = vpop.f32.mrb[0].mxu0
        %v1081 = vadd.f32 0.0, %v1080
        %1082 = vmatprep.mubr.f32.mxu0 0.0
        %1083 = vmatmul.mubr.f32.gmra.mrb[0].mxu0 %v876
        %v1084 = vpop.f32.mrb[0].mxu0
        %v1085 = vadd.f32 0.0, %v1084
        %v1086 = vpop.f32.mrb[0].mxu0
        %v1087 = vadd.f32 0.0, %v1086
        %1088 = vmatprep.mubr.f32.mxu0 0.0
        %1089 = vmatmul.mubr.f32.gmra.mrb[0].mxu0 %v879
        %v1090 = vpop.f32.mrb[0].mxu0
        %v1091 = vadd.f32 0.0, %v1090
        %v1092 = vpop.f32.mrb[0].mxu0
        %v1093 = vadd.f32 0.0, %v1092
        %1094 = vmatprep.mubr.f32.mxu0 0.0
        %1095 = vmatmul.mubr.f32.gmra.mrb[0].mxu0 %v882
        %v1096 = vpop.f32.mrb[0].mxu0
        %v1097 = vadd.f32 0.0, %v1096
        %v1098 = vpop.f32.mrb[0].mxu0
        %v1099 = vadd.f32 0.0, %v1098
        %1100 = vmatprep.mubr.f32.mxu0 0.0
        %1101 = vmatmul.mubr.f32.gmra.mrb[0].mxu0 %v885
        %v1102 = vpop.f32.mrb[0].mxu0
        %v1103 = vadd.f32 0.0, %v1102
        %v1104 = vpop.f32.mrb[0].mxu0
        %v1105 = vadd.f32 0.0, %v1104
        %1106 = vmatprep.mubr.f32.mxu0 0.0
        %1107 = vmatmul.mubr.f32.gmra.mrb[0].mxu0 %v888
        %v1108 = vpop.f32.mrb[0].mxu0
        %v1109 = vadd.f32 0.0, %v1108
        %v1110 = vpop.f32.mrb[0].mxu0
        %v1111 = vadd.f32 0.0, %v1110
        %1112 = vmatprep.mubr.f32.mxu0 0.0
        %1113 = vmatmul.mubr.f32.gmra.mrb[0].mxu0 %v891
        %v1114 = vpop.f32.mrb[0].mxu0
        %v1115 = vadd.f32 0.0, %v1114
        %v1116 = vpop.f32.mrb[0].mxu0
        %v1117 = vadd.f32 0.0, %v1116
        %1118 = vdwg.mxu0
        %1119 = vst [vmem:[%s353] sm:$0xff] %v960
        %1120 = vst [vmem:[%s353 + $0x8] sm:$0xff] %v962
        %1121 = vst [vmem:[%s353 + $0x10] sm:$0xff] %v1073
        %1122 = vst [vmem:[%s353 + $0x18] sm:$0xff] %v1075
        %1123 = vst [vmem:[%s353 + $0x20] sm:$0xff] %v966
        %1124 = vst [vmem:[%s353 + $0x28] sm:$0xff] %v968
        %1125 = vst [vmem:[%s353 + $0x30] sm:$0xff] %v1079
        %1126 = vst [vmem:[%s353 + $0x38] sm:$0xff] %v1081
        %1127 = vst [vmem:[%s353 + $0x40] sm:$0xff] %v972
        %1128 = vst [vmem:[%s353 + $0x48] sm:$0xff] %v974
        %1129 = vst [vmem:[%s353 + $0x50] sm:$0xff] %v1085
        %1130 = vst [vmem:[%s353 + $0x58] sm:$0xff] %v1087
        %1131 = vst [vmem:[%s353 + $0x60] sm:$0xff] %v978
        %1132 = vst [vmem:[%s353 + $0x68] sm:$0xff] %v980
        %1133 = vst [vmem:[%s353 + $0x70] sm:$0xff] %v1091
        %1134 = vst [vmem:[%s353 + $0x78] sm:$0xff] %v1093
        %1135 = vst [vmem:[%s353 + $0x80] sm:$0xff] %v984
        %1136 = vst [vmem:[%s353 + $0x88] sm:$0xff] %v986
        %1137 = vst [vmem:[%s353 + $0x90] sm:$0xff] %v1097
        %1138 = vst [vmem:[%s353 + $0x98] sm:$0xff] %v1099
        %1139 = vst [vmem:[%s353 + $0xa0] sm:$0xff] %v990
        %1140 = vst [vmem:[%s353 + $0xa8] sm:$0xff] %v992
        %1141 = vst [vmem:[%s353 + $0xb0] sm:$0xff] %v1103
        %1142 = vst [vmem:[%s353 + $0xb8] sm:$0xff] %v1105
        %1143 = vst [vmem:[%s353 + $0xc0] sm:$0xff] %v996
        %1144 = vst [vmem:[%s353 + $0xc8] sm:$0xff] %v998
        %1145 = vst [vmem:[%s353 + $0xd0] sm:$0xff] %v1109
        %1146 = vst [vmem:[%s353 + $0xd8] sm:$0xff] %v1111
        %1147 = vst [vmem:[%s353 + $0xe0] sm:$0xff] %v1002
        %1148 = vst [vmem:[%s353 + $0xe8] sm:$0xff] %v1004
        %1149 = vst [vmem:[%s353 + $0xf0] sm:$0xff] %v1115
        %1150 = vst [vmem:[%s353 + $0xf8] sm:$0xff] %v1117
        %s1151 = sand.u32 %s154, 1
        %s1152 = scalar_lea.sflag [#allocation5], %s1151
        %s1153 = sand.u32 %s154, 1
        %s1154 = smul.addr %s1153, 256
        %s1155 = scalar_lea.vmem [#allocation11], %s1154
        %s1156 = sand.u32 %s182, 1
        %s1157 = scalar_lea.sflag [#allocation13], %s1156
        %s1158 = sand.u32 %s182, 1
        %s1159 = smul.addr %s1158, 256
        %s1160 = scalar_lea.vmem [#allocation12], %s1159
        // Predicated region
        $region53: #{tpu_custom_call.1} parent=35 // pred_check
          %p1161 = pneg %p164
        $region54: #{tpu_custom_call.1} parent=35 // pred_check_branch
          %1163 = sbr.rel (%p1161) target = $region56
        $region55: #{tpu_custom_call.1} parent=35 // pred_region
          %s1164 = smul.u32 4, %s35
          %s1166 = ssub.s32 4096, 4096
          %1167 = vsyncadd %s1152, %s1166
          %s1168 = smul.addr %s34, 32
          %s1169 = sadd.s32 %s1164, %s1168
          %s1170 = smul.addr %s1169, 128
          %s1171 = scalar_lea.hbm %s4, %s1170
          %s1172 = sshll.u32 %s1155, 4
          %s1173 = int_to_ptr.vmem [resolvable:$true] %s1172
          %1178 = dma.vmem_to_hbm [thread:$0]  %s1173, 4096, %s1171, %s1152, 512, 512, 32
        $region56: #{tpu_custom_call.1} parent=35 // pred_fallthru
          _
        // Predicated region
        $region57: #{tpu_custom_call.1} parent=35 // pred_check
          %p1179 = pneg %p192
        $region58: #{tpu_custom_call.1} parent=35 // pred_check_branch
          %1181 = sbr.rel (%p1179) target = $region60
        $region59: #{tpu_custom_call.1} parent=35 // pred_region
          %s1182 = smul.u32 4, %s35
          %s1184 = ssub.s32 4096, 4096
          %1185 = vsyncadd %s1157, %s1184
          %s1186 = smul.addr %s34, 32
          %s1187 = sadd.s32 %s1182, %s1186
          %s1188 = smul.addr %s1187, 128
          %s1189 = scalar_lea.hbm %s5, %s1188
          %s1190 = sshll.u32 %s1160, 4
          %s1191 = int_to_ptr.vmem [resolvable:$true] %s1190
          %1196 = dma.vmem_to_hbm [thread:$0]  %s1191, 4096, %s1189, %s1157, 512, 512, 32
        $region60: #{tpu_custom_call.1} parent=35 // pred_fallthru
          _
      $region36: #{tpu_custom_call.1} parent=5 // pred_fallthru
        _
      %p1197 = scmp.le.s32.totalorder 2, %s25
      // Predicated region
      $region61: #{tpu_custom_call.1} parent=5 // pred_check
        %p1198 = pneg %p1197
      $region62: #{tpu_custom_call.1} parent=5 // pred_check_branch
        %1200 = sbr.rel (%p1198) target = $region64
      $region63: #{tpu_custom_call.1} parent=5 // pred_region
        %s1201 = ssub.s32 %s25, 2
        // Predicated region
        $region65: #{tpu_custom_call.1} parent=63 // pred_check
          %p1202 = pneg %p170
        $region66: #{tpu_custom_call.1} parent=63 // pred_check_branch
          %1204 = sbr.rel (%p1202) target = $region68
        $region67: #{tpu_custom_call.1} parent=63 // pred_region
          %s1205 = sand.u32 %s155, 1
          %s1206 = scalar_lea.sflag [#allocation5], %s1205
          %s1207 = sand.u32 %s155, 1
          %s1208 = smul.addr %s1207, 256
          %s1209 = scalar_lea.vmem [#allocation11], %s1208
          %1210 = dma.done %s1206, 4096
        $region68: #{tpu_custom_call.1} parent=63 // pred_fallthru
          _
        // Predicated region
        $region69: #{tpu_custom_call.1} parent=63 // pred_check
          %p1211 = pneg %p198
        $region70: #{tpu_custom_call.1} parent=63 // pred_check_branch
          %1213 = sbr.rel (%p1211) target = $region72
        $region71: #{tpu_custom_call.1} parent=63 // pred_region
          %s1214 = sand.u32 %s183, 1
          %s1215 = scalar_lea.sflag [#allocation13], %s1214
          %s1216 = sand.u32 %s183, 1
          %s1217 = smul.addr %s1216, 256
          %s1218 = scalar_lea.vmem [#allocation12], %s1217
          %1219 = dma.done %s1215, 4096
        $region72: #{tpu_custom_call.1} parent=63 // pred_fallthru
          _
      $region64: #{tpu_custom_call.1} parent=5 // pred_fallthru
        _
    $region6: #{tpu_custom_call.1} parent=1 // loop_footer
      %s29 = sadd.s32 1, %s25
    $region7: #{tpu_custom_call.1} parent=1 // loop_footer_branch
      %24 = sbr.rel target = $region3
    $region8: #{tpu_custom_call.1} parent=1 // loop_exit
      _
    %1220 = vsyncpa [#allocation4], 1
    %s1221 = scalar_lea.sflag [#allocation4], 1
    %1222 = vsyncpa %s1221, 1
    %1223 = vsyncpa [#allocation7], 1
    %s1224 = scalar_lea.sflag [#allocation7], 1
    %1225 = vsyncpa %s1224, 1
    %1226 = vsyncpa [#allocation10], 1
    %1227 = vsyncpa [#allocation5], 1
    %s1228 = scalar_lea.sflag [#allocation5], 1
    %1229 = vsyncpa %s1228, 1
    %1230 = vsyncpa [#allocation13], 1
    %s1231 = scalar_lea.sflag [#allocation13], 1
    %1232 = vsyncpa %s1231, 1

</llo_original>
